<compile_context>
chip_gen: v5e
topology: v5e:2x2
jax: 0.10.0
libtpu: 0.0.40
codegen_flags: <defaults>
</compile_context>

<pallas_src>
import numpy as np
import jax
import jax.numpy as jnp
from jax.experimental import pallas as pl
from jax.experimental.pallas import tpu as pltpu


# ------------------------------ fused model kernel -----------------------------

def make_lstm_regressor_kernel(T, Bp, H, num_layers, meta):
    """Returns a kernel computing the full stacked-LSTM + FC forward pass.

    Kernel args:
      x_ref    : (T*Bp, input_size) VMEM, time-major, batch padded
      slab_ref : (rows, C) VMEM, all weights/biases packed (see pack_weight_slab)
      out_ref  : (Bp, 1) VMEM
      xg_scr   : (T*Bp, 4H) VMEM scratch for the hoisted layer-0 projection
    """

    def kernel(x_ref, slab_ref, out_ref, xg_scr):
        def piece(name):
            off, r, c = meta[name]          # static Python ints -> free view
            return slab_ref[off:off + r, 0:c]

        # Hoist all weight loads out of the unrolled recurrence (one load each).
        w_ihT = [piece(f"w_ihT_{l}") for l in range(num_layers)]   # (in_l, 4H)
        w_hhT = [piece(f"w_hhT_{l}") for l in range(num_layers)]   # (H, 4H)
        bias = [piece(f"b_{l}") for l in range(num_layers)]        # (1, 4H)
        fc_w = piece("fc_w")                                       # (1, H)
        fc_b = piece("fc_b")                                       # (1, 1)

        # Layer-0 input projection for ALL timesteps: one MXU matmul, parked in
        # VMEM scratch so its vregs are not live across the whole wavefront.
        xg_scr[...] = jnp.dot(x_ref[...], w_ihT[0],
                              preferred_element_type=jnp.float32) + bias[0]

        h = [jnp.zeros((Bp, H), jnp.float32) for _ in range(num_layers)]
        c = [jnp.zeros((Bp, H), jnp.float32) for _ in range(num_layers)]

        def cell(gates, c_prev):
            # Full-vreg nonlinearities (4H = 128 lanes when H = 32):
            # 2 EUP pushes per step instead of 4.
            sg = jax.nn.sigmoid(gates)
            th = jnp.tanh(gates)
            i_g = sg[:, 0 * H:1 * H]
            f_g = sg[:, 1 * H:2 * H]
            g_g = th[:, 2 * H:3 * H]
            o_g = sg[:, 3 * H:4 * H]
            c_new = f_g * c_prev + i_g * g_g
            h_new = o_g * jnp.tanh(c_new)
            return h_new, c_new

        # Wavefront: step s, layer l handles timestep t = s - l.  Layers are
        # processed top-down (l = L-1 .. 0) so layer l reads h[l-1] from the
        # previous wavefront step before layer l-1 overwrites it this step.
        for s in range(T + num_layers - 1):
            for l in range(num_layers - 1, -1, -1):
                t = s - l
                if t < 0 or t >= T:
                    continue
                if l == 0:
                    gates = (xg_scr[t * Bp:(t + 1) * Bp, :]
                             + jnp.dot(h[0], w_hhT[0],
                                       preferred_element_type=jnp.float32))
                else:
                    # Two dots summed directly -> single result-buffer
                    # accumulation on v7x (MRB).
                    gates = (jnp.dot(h[l - 1], w_ihT[l],
                                     preferred_element_type=jnp.float32)
                             + jnp.dot(h[l], w_hhT[l],
                                       preferred_element_type=jnp.float32)
                             + bias[l])
                h[l], c[l] = cell(gates, c[l])
        # TODO(synk): nn.LSTM inter-layer dropout is training-mode only; this is
        # the eval-mode forward, so dropout is (correctly) a no-op.

        # FC head on the last layer's final hidden state:
        # VPU multiply + lane reduce (no N=1 MXU matmul, no extra launch).
        out_ref[...] = (jnp.sum(h[num_layers - 1] * fc_w, axis=-1, keepdims=True)
                        + fc_b)

    return kernel


# ------------------------------- weight packing --------------------------------

def pack_weight_slab(params, H, num_layers):
    """Pack all weights/biases/FC into one (rows, C) f32 slab.

    Returns (slab, meta) where meta[name] = (row_offset, nrows, ncols) with
    8-aligned row offsets and columns zero-padded to C = roundup(4H, 128).
    """
    C = ((4 * H + 127) // 128) * 128
    pieces, meta = [], {}
    off = 0

    def add(name, arr):
        nonlocal off
        arr = jnp.asarray(arr, jnp.float32)
        r, c = arr.shape
        padded = jnp.pad(arr, ((0, (-r) % 8), (0, C - c)))
        meta[name] = (off, r, c)
        pieces.append(padded)
        off += padded.shape[0]

    for l, layer in enumerate(params["lstm"]):
        add(f"w_ihT_{l}", layer["w_ih"].T)    # (in_features, 4H)
        add(f"w_hhT_{l}", layer["w_hh"].T)    # (H, 4H)
        add(f"b_{l}", layer["b"])             # (1, 4H) = b_ih + b_hh
    add("fc_w", params["fc_w"])               # (1, H)
    add("fc_b", params["fc_b"])               # (1, 1)
    return jnp.concatenate(pieces, axis=0), meta


# --------------------------------- full model ----------------------------------

def lstm_regressor_forward(x_btf, params):
    """Equivalent of LSTMRegressor.forward (inference / eval mode).

    x_btf: (B, T, input_size) float32 (batch_first, like the PyTorch module).
    Returns (B, 1) float32.
    """
    x = x_btf.astype(jnp.float32)
    B, T, I = x.shape
    num_layers = len(params["lstm"])
    H = params["lstm"][0]["w_hh"].shape[1]

    # Pad batch to a multiple of 8 sublanes -> all per-timestep slices aligned.
    Bp = max(8, ((B + 7) // 8) * 8)
    x = jnp.pad(x, ((0, Bp - B), (0, 0), (0, 0)))
    # Time-major, flattened: rows [t*Bp:(t+1)*Bp] hold timestep t.
    x2d = jnp.transpose(x, (1, 0, 2)).reshape(T * Bp, I)

    slab, meta = pack_weight_slab(params, H, num_layers)

    vmem = pl.BlockSpec(memory_space=pltpu.MemorySpace.VMEM)
    out = pl.pallas_call(
        make_lstm_regressor_kernel(T, Bp, H, num_layers, meta),
        out_shape=jax.ShapeDtypeStruct((Bp, 1), jnp.float32),
        in_specs=[vmem, vmem],
        out_specs=vmem,
        scratch_shapes=[pltpu.VMEM((T * Bp, 4 * H), jnp.float32)],
        compiler_params=pltpu.CompilerParams(
            vmem_limit_bytes=32 * 1024 * 1024),
    )(x2d, slab)
    # TODO(synk): if batch grows, add a leading batch-tile grid axis with
    # dimension_semantics=("parallel",) so v7x's second TensorCore gets work.
    return out[:B]


# ------------------------------- parameter init --------------------------------

def init_params(key, input_size, hidden_size, num_layers):
    """Deterministic init matching PyTorch default U(-1/sqrt(H), 1/sqrt(H))."""
    k = 1.0 / np.sqrt(hidden_size)
    layers = []
    for layer in range(num_layers):
        in_f = input_size if layer == 0 else hidden_size
        key, k1, k2, k3, k4 = jax.random.split(key, 5)
        w_ih = jax.random.uniform(k1, (4 * hidden_size, in_f), jnp.float32, -k, k)
        w_hh = jax.random.uniform(k2, (4 * hidden_size, hidden_size), jnp.float32, -k, k)
        b_ih = jax.random.uniform(k3, (4 * hidden_size,), jnp.float32, -k, k)
        b_hh = jax.random.uniform(k4, (4 * hidden_size,), jnp.float32, -k, k)
        layers.append({"w_ih": w_ih, "w_hh": w_hh, "b": (b_ih + b_hh)[None, :]})
    key, k5, k6 = jax.random.split(key, 3)
    fc_w = jax.random.uniform(k5, (1, hidden_size), jnp.float32, -k, k)
    fc_b = jax.random.uniform(k6, (1, 1), jnp.float32, -k, k)
    return {"lstm": layers, "fc_w": fc_w, "fc_b": fc_b}


# ------------------------------ pure-JAX reference ------------------------------

def lstm_regressor_reference(x_btf, params):
    x = x_btf.astype(jnp.float32)
    B = x.shape[0]
    for layer in params["lstm"]:
        w_ih, w_hh, b = layer["w_ih"], layer["w_hh"], layer["b"][0]
        H = w_hh.shape[1]

        def step(carry, x_t):
            h, c = carry
            gates = x_t @ w_ih.T + h @ w_hh.T + b
            i = jax.nn.sigmoid(gates[:, :H])
            f = jax.nn.sigmoid(gates[:, H:2 * H])
            g = jnp.tanh(gates[:, 2 * H:3 * H])
            o = jax.nn.sigmoid(gates[:, 3 * H:])
            c = f * c + i * g
            h = o * jnp.tanh(c)
            return (h, c), h

        h0 = jnp.zeros((B, H), jnp.float32)
        c0 = jnp.zeros((B, H), jnp.float32)
        _, hs = jax.lax.scan(step, (h0, c0), jnp.transpose(x, (1, 0, 2)))
        x = jnp.transpose(hs, (1, 0, 2))
    h_last = x[:, -1, :]
    return h_last @ params["fc_w"].T + params["fc_b"]


# ------------------------------------- main -------------------------------------

if __name__ == "__main__":
    B, T, INPUT_SIZE, HIDDEN, LAYERS = 2, 8, 4, 32, 2

    key = jax.random.PRNGKey(0)
    key, kx, kp = jax.random.split(key, 3)
    x = jax.random.normal(kx, (B, T, INPUT_SIZE), jnp.float32)
    params = init_params(kp, INPUT_SIZE, HIDDEN, LAYERS)

    y = jax.block_until_ready(lstm_regressor_forward(x, params))
    y_ref = jax.block_until_ready(lstm_regressor_reference(x, params))

    assert y.shape == (B, 1), y.shape
    np.testing.assert_allclose(np.asarray(y), np.asarray(y_ref),
                               rtol=1e-5, atol=1e-5)
    print("KERNEL_OK")
</pallas_src>

<mosaic_0001>
module attributes {stable_mosaic.version = 11 : i64} {
  func.func @kernel(%arg0: memref<64x4xf32, #tpu.memory_space<vmem>>, %arg1: memref<136x128xf32, #tpu.memory_space<vmem>>, %arg2: memref<8x1xf32, #tpu.memory_space<vmem>>, %arg3: memref<64x128xf32, #tpu.memory_space<vmem>>) attributes {dimension_semantics = [], scalar_prefetch = 0 : i64, scratch_operands = 1 : i64, tpu.core_type = #tpu.core_type<tc>} {
    %c0 = arith.constant 0 : index
    %c0_0 = arith.constant 0 : index
    %0 = vector.load %arg1[%c0, %c0_0] : memref<136x128xf32, #tpu.memory_space<vmem>>, vector<4x128xf32>
    %c48 = arith.constant 48 : index
    %c0_1 = arith.constant 0 : index
    %1 = vector.load %arg1[%c48, %c0_1] : memref<136x128xf32, #tpu.memory_space<vmem>>, vector<32x128xf32>
    %c8 = arith.constant 8 : index
    %c0_2 = arith.constant 0 : index
    %2 = vector.load %arg1[%c8, %c0_2] : memref<136x128xf32, #tpu.memory_space<vmem>>, vector<32x128xf32>
    %c80 = arith.constant 80 : index
    %c0_3 = arith.constant 0 : index
    %3 = vector.load %arg1[%c80, %c0_3] : memref<136x128xf32, #tpu.memory_space<vmem>>, vector<32x128xf32>
    %c40 = arith.constant 40 : index
    %c0_4 = arith.constant 0 : index
    %4 = vector.load %arg1[%c40, %c0_4] : memref<136x128xf32, #tpu.memory_space<vmem>>, vector<1x128xf32>
    %c112 = arith.constant 112 : index
    %c0_5 = arith.constant 0 : index
    %5 = vector.load %arg1[%c112, %c0_5] : memref<136x128xf32, #tpu.memory_space<vmem>>, vector<1x128xf32>
    %c120 = arith.constant 120 : index
    %c0_6 = arith.constant 0 : index
    %6 = vector.load %arg1[%c120, %c0_6] : memref<136x128xf32, #tpu.memory_space<vmem>>, vector<1x32xf32>
    %c128 = arith.constant 128 : index
    %c0_7 = arith.constant 0 : index
    %7 = vector.load %arg1[%c128, %c0_7] : memref<136x128xf32, #tpu.memory_space<vmem>>, vector<1x1xf32>
    %c0_8 = arith.constant 0 : index
    %c0_9 = arith.constant 0 : index
    %8 = vector.load %arg0[%c0_8, %c0_9] : memref<64x4xf32, #tpu.memory_space<vmem>>, vector<64x4xf32>
    %cst = arith.constant dense<0.000000e+00> : vector<64x128xf32>
    %9 = tpu.matmul %8, %0, %cst {dimension_numbers = #tpu.dot_dimension_numbers<[1], [0], [0], [1], [0, 0, 1, 1], [], []>} : vector<64x4xf32>, vector<4x128xf32>, vector<64x128xf32> -> vector<64x128xf32>
    %10 = vector.broadcast %4 : vector<1x128xf32> to vector<64x128xf32>
    %11 = arith.addf %9, %10 : vector<64x128xf32>
    %c0_10 = arith.constant 0 : index
    %c0_11 = arith.constant 0 : index
    %12 = vector.load %arg3[%c0_10, %c0_11] : memref<64x128xf32, #tpu.memory_space<vmem>>, vector<64x128xf32>
    tpu.vector_store %arg3[%c0_10, %c0_11], %11 {strides = array<i32>} : memref<64x128xf32, #tpu.memory_space<vmem>>, vector<64x128xf32>,
    %cst_12 = arith.constant 0.000000e+00 : f32
    %13 = vector.broadcast %cst_12 : f32 to vector<8x32xf32>
    %cst_13 = arith.constant 0.000000e+00 : f32
    %14 = vector.broadcast %cst_13 : f32 to vector<8x32xf32>
    %cst_14 = arith.constant 0.000000e+00 : f32
    %15 = vector.broadcast %cst_14 : f32 to vector<8x32xf32>
    %cst_15 = arith.constant 0.000000e+00 : f32
    %16 = vector.broadcast %cst_15 : f32 to vector<8x32xf32>
    %c0_16 = arith.constant 0 : index
    %c0_17 = arith.constant 0 : index
    %17 = vector.load %arg3[%c0_16, %c0_17] : memref<64x128xf32, #tpu.memory_space<vmem>>, vector<8x128xf32>
    %cst_18 = arith.constant dense<0.000000e+00> : vector<8x128xf32>
    %18 = tpu.matmul %13, %2, %cst_18 {dimension_numbers = #tpu.dot_dimension_numbers<[1], [0], [0], [1], [0, 0, 1, 1], [], []>} : vector<8x32xf32>, vector<32x128xf32>, vector<8x128xf32> -> vector<8x128xf32>
    %19 = arith.addf %17, %18 : vector<8x128xf32>
    %20 = arith.negf %19 : vector<8x128xf32>
    %21 = math.exp %20 : vector<8x128xf32>
    %cst_19 = arith.constant 1.000000e+00 : f32
    %22 = vector.broadcast %cst_19 : f32 to vector<8x128xf32>
    %23 = arith.addf %22, %21 : vector<8x128xf32>
    %24 = arith.divf %22, %23 : vector<8x128xf32>
    %25 = math.tanh %19 : vector<8x128xf32>
    %26 = vector.extract_strided_slice %24 {offsets = [0, 0], sizes = [8, 32], strides = [1, 1]} : vector<8x128xf32> to vector<8x32xf32>
    %27 = vector.extract_strided_slice %24 {offsets = [0, 32], sizes = [8, 32], strides = [1, 1]} : vector<8x128xf32> to vector<8x32xf32>
    %28 = vector.extract_strided_slice %25 {offsets = [0, 64], sizes = [8, 32], strides = [1, 1]} : vector<8x128xf32> to vector<8x32xf32>
    %29 = vector.extract_strided_slice %24 {offsets = [0, 96], sizes = [8, 32], strides = [1, 1]} : vector<8x128xf32> to vector<8x32xf32>
    %30 = arith.mulf %27, %15 : vector<8x32xf32>
    %31 = arith.mulf %26, %28 : vector<8x32xf32>
    %32 = arith.addf %30, %31 : vector<8x32xf32>
    %33 = math.tanh %32 : vector<8x32xf32>
    %34 = arith.mulf %29, %33 : vector<8x32xf32>
    %cst_20 = arith.constant dense<0.000000e+00> : vector<8x128xf32>
    %35 = tpu.matmul %34, %1, %cst_20 {dimension_numbers = #tpu.dot_dimension_numbers<[1], [0], [0], [1], [0, 0, 1, 1], [], []>} : vector<8x32xf32>, vector<32x128xf32>, vector<8x128xf32> -> vector<8x128xf32>
    %cst_21 = arith.constant dense<0.000000e+00> : vector<8x128xf32>
    %36 = tpu.matmul %14, %3, %cst_21 {dimension_numbers = #tpu.dot_dimension_numbers<[1], [0], [0], [1], [0, 0, 1, 1], [], []>} : vector<8x32xf32>, vector<32x128xf32>, vector<8x128xf32> -> vector<8x128xf32>
    %37 = arith.addf %35, %36 : vector<8x128xf32>
    %38 = vector.broadcast %5 : vector<1x128xf32> to vector<8x128xf32>
    %39 = arith.addf %37, %38 : vector<8x128xf32>
    %40 = arith.negf %39 : vector<8x128xf32>
    %41 = math.exp %40 : vector<8x128xf32>
    %cst_22 = arith.constant 1.000000e+00 : f32
    %42 = vector.broadcast %cst_22 : f32 to vector<8x128xf32>
    %43 = arith.addf %42, %41 : vector<8x128xf32>
    %44 = arith.divf %42, %43 : vector<8x128xf32>
    %45 = math.tanh %39 : vector<8x128xf32>
    %46 = vector.extract_strided_slice %44 {offsets = [0, 0], sizes = [8, 32], strides = [1, 1]} : vector<8x128xf32> to vector<8x32xf32>
    %47 = vector.extract_strided_slice %44 {offsets = [0, 32], sizes = [8, 32], strides = [1, 1]} : vector<8x128xf32> to vector<8x32xf32>
    %48 = vector.extract_strided_slice %45 {offsets = [0, 64], sizes = [8, 32], strides = [1, 1]} : vector<8x128xf32> to vector<8x32xf32>
    %49 = vector.extract_strided_slice %44 {offsets = [0, 96], sizes = [8, 32], strides = [1, 1]} : vector<8x128xf32> to vector<8x32xf32>
    %50 = arith.mulf %47, %16 : vector<8x32xf32>
    %51 = arith.mulf %46, %48 : vector<8x32xf32>
    %52 = arith.addf %50, %51 : vector<8x32xf32>
    %53 = math.tanh %52 : vector<8x32xf32>
    %54 = arith.mulf %49, %53 : vector<8x32xf32>
    %c8_23 = arith.constant 8 : index
    %c0_24 = arith.constant 0 : index
    %55 = vector.load %arg3[%c8_23, %c0_24] : memref<64x128xf32, #tpu.memory_space<vmem>>, vector<8x128xf32>
    %cst_25 = arith.constant dense<0.000000e+00> : vector<8x128xf32>
    %56 = tpu.matmul %34, %2, %cst_25 {dimension_numbers = #tpu.dot_dimension_numbers<[1], [0], [0], [1], [0, 0, 1, 1], [], []>} : vector<8x32xf32>, vector<32x128xf32>, vector<8x128xf32> -> vector<8x128xf32>
    %57 = arith.addf %55, %56 : vector<8x128xf32>
    %58 = arith.negf %57 : vector<8x128xf32>
    %59 = math.exp %58 : vector<8x128xf32>
    %cst_26 = arith.constant 1.000000e+00 : f32
    %60 = vector.broadcast %cst_26 : f32 to vector<8x128xf32>
    %61 = arith.addf %60, %59 : vector<8x128xf32>
    %62 = arith.divf %60, %61 : vector<8x128xf32>
    %63 = math.tanh %57 : vector<8x128xf32>
    %64 = vector.extract_strided_slice %62 {offsets = [0, 0], sizes = [8, 32], strides = [1, 1]} : vector<8x128xf32> to vector<8x32xf32>
    %65 = vector.extract_strided_slice %62 {offsets = [0, 32], sizes = [8, 32], strides = [1, 1]} : vector<8x128xf32> to vector<8x32xf32>
    %66 = vector.extract_strided_slice %63 {offsets = [0, 64], sizes = [8, 32], strides = [1, 1]} : vector<8x128xf32> to vector<8x32xf32>
    %67 = vector.extract_strided_slice %62 {offsets = [0, 96], sizes = [8, 32], strides = [1, 1]} : vector<8x128xf32> to vector<8x32xf32>
    %68 = arith.mulf %65, %32 : vector<8x32xf32>
    %69 = arith.mulf %64, %66 : vector<8x32xf32>
    %70 = arith.addf %68, %69 : vector<8x32xf32>
    %71 = math.tanh %70 : vector<8x32xf32>
    %72 = arith.mulf %67, %71 : vector<8x32xf32>
    %cst_27 = arith.constant dense<0.000000e+00> : vector<8x128xf32>
    %73 = tpu.matmul %72, %1, %cst_27 {dimension_numbers = #tpu.dot_dimension_numbers<[1], [0], [0], [1], [0, 0, 1, 1], [], []>} : vector<8x32xf32>, vector<32x128xf32>, vector<8x128xf32> -> vector<8x128xf32>
    %cst_28 = arith.constant dense<0.000000e+00> : vector<8x128xf32>
    %74 = tpu.matmul %54, %3, %cst_28 {dimension_numbers = #tpu.dot_dimension_numbers<[1], [0], [0], [1], [0, 0, 1, 1], [], []>} : vector<8x32xf32>, vector<32x128xf32>, vector<8x128xf32> -> vector<8x128xf32>
    %75 = arith.addf %73, %74 : vector<8x128xf32>
    %76 = vector.broadcast %5 : vector<1x128xf32> to vector<8x128xf32>
    %77 = arith.addf %75, %76 : vector<8x128xf32>
    %78 = arith.negf %77 : vector<8x128xf32>
    %79 = math.exp %78 : vector<8x128xf32>
    %cst_29 = arith.constant 1.000000e+00 : f32
    %80 = vector.broadcast %cst_29 : f32 to vector<8x128xf32>
    %81 = arith.addf %80, %79 : vector<8x128xf32>
    %82 = arith.divf %80, %81 : vector<8x128xf32>
    %83 = math.tanh %77 : vector<8x128xf32>
    %84 = vector.extract_strided_slice %82 {offsets = [0, 0], sizes = [8, 32], strides = [1, 1]} : vector<8x128xf32> to vector<8x32xf32>
    %85 = vector.extract_strided_slice %82 {offsets = [0, 32], sizes = [8, 32], strides = [1, 1]} : vector<8x128xf32> to vector<8x32xf32>
    %86 = vector.extract_strided_slice %83 {offsets = [0, 64], sizes = [8, 32], strides = [1, 1]} : vector<8x128xf32> to vector<8x32xf32>
    %87 = vector.extract_strided_slice %82 {offsets = [0, 96], sizes = [8, 32], strides = [1, 1]} : vector<8x128xf32> to vector<8x32xf32>
    %88 = arith.mulf %85, %52 : vector<8x32xf32>
    %89 = arith.mulf %84, %86 : vector<8x32xf32>
    %90 = arith.addf %88, %89 : vector<8x32xf32>
    %91 = math.tanh %90 : vector<8x32xf32>
    %92 = arith.mulf %87, %91 : vector<8x32xf32>
    %c16 = arith.constant 16 : index
    %c0_30 = arith.constant 0 : index
    %93 = vector.load %arg3[%c16, %c0_30] : memref<64x128xf32, #tpu.memory_space<vmem>>, vector<8x128xf32>
    %cst_31 = arith.constant dense<0.000000e+00> : vector<8x128xf32>
    %94 = tpu.matmul %72, %2, %cst_31 {dimension_numbers = #tpu.dot_dimension_numbers<[1], [0], [0], [1], [0, 0, 1, 1], [], []>} : vector<8x32xf32>, vector<32x128xf32>, vector<8x128xf32> -> vector<8x128xf32>
    %95 = arith.addf %93, %94 : vector<8x128xf32>
    %96 = arith.negf %95 : vector<8x128xf32>
    %97 = math.exp %96 : vector<8x128xf32>
    %cst_32 = arith.constant 1.000000e+00 : f32
    %98 = vector.broadcast %cst_32 : f32 to vector<8x128xf32>
    %99 = arith.addf %98, %97 : vector<8x128xf32>
    %100 = arith.divf %98, %99 : vector<8x128xf32>
    %101 = math.tanh %95 : vector<8x128xf32>
    %102 = vector.extract_strided_slice %100 {offsets = [0, 0], sizes = [8, 32], strides = [1, 1]} : vector<8x128xf32> to vector<8x32xf32>
    %103 = vector.extract_strided_slice %100 {offsets = [0, 32], sizes = [8, 32], strides = [1, 1]} : vector<8x128xf32> to vector<8x32xf32>
    %104 = vector.extract_strided_slice %101 {offsets = [0, 64], sizes = [8, 32], strides = [1, 1]} : vector<8x128xf32> to vector<8x32xf32>
    %105 = vector.extract_strided_slice %100 {offsets = [0, 96], sizes = [8, 32], strides = [1, 1]} : vector<8x128xf32> to vector<8x32xf32>
    %106 = arith.mulf %103, %70 : vector<8x32xf32>
    %107 = arith.mulf %102, %104 : vector<8x32xf32>
    %108 = arith.addf %106, %107 : vector<8x32xf32>
    %109 = math.tanh %108 : vector<8x32xf32>
    %110 = arith.mulf %105, %109 : vector<8x32xf32>
    %cst_33 = arith.constant dense<0.000000e+00> : vector<8x128xf32>
    %111 = tpu.matmul %110, %1, %cst_33 {dimension_numbers = #tpu.dot_dimension_numbers<[1], [0], [0], [1], [0, 0, 1, 1], [], []>} : vector<8x32xf32>, vector<32x128xf32>, vector<8x128xf32> -> vector<8x128xf32>
    %cst_34 = arith.constant dense<0.000000e+00> : vector<8x128xf32>
    %112 = tpu.matmul %92, %3, %cst_34 {dimension_numbers = #tpu.dot_dimension_numbers<[1], [0], [0], [1], [0, 0, 1, 1], [], []>} : vector<8x32xf32>, vector<32x128xf32>, vector<8x128xf32> -> vector<8x128xf32>
    %113 = arith.addf %111, %112 : vector<8x128xf32>
    %114 = vector.broadcast %5 : vector<1x128xf32> to vector<8x128xf32>
    %115 = arith.addf %113, %114 : vector<8x128xf32>
    %116 = arith.negf %115 : vector<8x128xf32>
    %117 = math.exp %116 : vector<8x128xf32>
    %cst_35 = arith.constant 1.000000e+00 : f32
    %118 = vector.broadcast %cst_35 : f32 to vector<8x128xf32>
    %119 = arith.addf %118, %117 : vector<8x128xf32>
    %120 = arith.divf %118, %119 : vector<8x128xf32>
    %121 = math.tanh %115 : vector<8x128xf32>
    %122 = vector.extract_strided_slice %120 {offsets = [0, 0], sizes = [8, 32], strides = [1, 1]} : vector<8x128xf32> to vector<8x32xf32>
    %123 = vector.extract_strided_slice %120 {offsets = [0, 32], sizes = [8, 32], strides = [1, 1]} : vector<8x128xf32> to vector<8x32xf32>
    %124 = vector.extract_strided_slice %121 {offsets = [0, 64], sizes = [8, 32], strides = [1, 1]} : vector<8x128xf32> to vector<8x32xf32>
    %125 = vector.extract_strided_slice %120 {offsets = [0, 96], sizes = [8, 32], strides = [1, 1]} : vector<8x128xf32> to vector<8x32xf32>
    %126 = arith.mulf %123, %90 : vector<8x32xf32>
    %127 = arith.mulf %122, %124 : vector<8x32xf32>
    %128 = arith.addf %126, %127 : vector<8x32xf32>
    %129 = math.tanh %128 : vector<8x32xf32>
    %130 = arith.mulf %125, %129 : vector<8x32xf32>
    %c24 = arith.constant 24 : index
    %c0_36 = arith.constant 0 : index
    %131 = vector.load %arg3[%c24, %c0_36] : memref<64x128xf32, #tpu.memory_space<vmem>>, vector<8x128xf32>
    %cst_37 = arith.constant dense<0.000000e+00> : vector<8x128xf32>
    %132 = tpu.matmul %110, %2, %cst_37 {dimension_numbers = #tpu.dot_dimension_numbers<[1], [0], [0], [1], [0, 0, 1, 1], [], []>} : vector<8x32xf32>, vector<32x128xf32>, vector<8x128xf32> -> vector<8x128xf32>
    %133 = arith.addf %131, %132 : vector<8x128xf32>
    %134 = arith.negf %133 : vector<8x128xf32>
    %135 = math.exp %134 : vector<8x128xf32>
    %cst_38 = arith.constant 1.000000e+00 : f32
    %136 = vector.broadcast %cst_38 : f32 to vector<8x128xf32>
    %137 = arith.addf %136, %135 : vector<8x128xf32>
    %138 = arith.divf %136, %137 : vector<8x128xf32>
    %139 = math.tanh %133 : vector<8x128xf32>
    %140 = vector.extract_strided_slice %138 {offsets = [0, 0], sizes = [8, 32], strides = [1, 1]} : vector<8x128xf32> to vector<8x32xf32>
    %141 = vector.extract_strided_slice %138 {offsets = [0, 32], sizes = [8, 32], strides = [1, 1]} : vector<8x128xf32> to vector<8x32xf32>
    %142 = vector.extract_strided_slice %139 {offsets = [0, 64], sizes = [8, 32], strides = [1, 1]} : vector<8x128xf32> to vector<8x32xf32>
    %143 = vector.extract_strided_slice %138 {offsets = [0, 96], sizes = [8, 32], strides = [1, 1]} : vector<8x128xf32> to vector<8x32xf32>
    %144 = arith.mulf %141, %108 : vector<8x32xf32>
    %145 = arith.mulf %140, %142 : vector<8x32xf32>
    %146 = arith.addf %144, %145 : vector<8x32xf32>
    %147 = math.tanh %146 : vector<8x32xf32>
    %148 = arith.mulf %143, %147 : vector<8x32xf32>
    %cst_39 = arith.constant dense<0.000000e+00> : vector<8x128xf32>
    %149 = tpu.matmul %148, %1, %cst_39 {dimension_numbers = #tpu.dot_dimension_numbers<[1], [0], [0], [1], [0, 0, 1, 1], [], []>} : vector<8x32xf32>, vector<32x128xf32>, vector<8x128xf32> -> vector<8x128xf32>
    %cst_40 = arith.constant dense<0.000000e+00> : vector<8x128xf32>
    %150 = tpu.matmul %130, %3, %cst_40 {dimension_numbers = #tpu.dot_dimension_numbers<[1], [0], [0], [1], [0, 0, 1, 1], [], []>} : vector<8x32xf32>, vector<32x128xf32>, vector<8x128xf32> -> vector<8x128xf32>
    %151 = arith.addf %149, %150 : vector<8x128xf32>
    %152 = vector.broadcast %5 : vector<1x128xf32> to vector<8x128xf32>
    %153 = arith.addf %151, %152 : vector<8x128xf32>
    %154 = arith.negf %153 : vector<8x128xf32>
    %155 = math.exp %154 : vector<8x128xf32>
    %cst_41 = arith.constant 1.000000e+00 : f32
    %156 = vector.broadcast %cst_41 : f32 to vector<8x128xf32>
    %157 = arith.addf %156, %155 : vector<8x128xf32>
    %158 = arith.divf %156, %157 : vector<8x128xf32>
    %159 = math.tanh %153 : vector<8x128xf32>
    %160 = vector.extract_strided_slice %158 {offsets = [0, 0], sizes = [8, 32], strides = [1, 1]} : vector<8x128xf32> to vector<8x32xf32>
    %161 = vector.extract_strided_slice %158 {offsets = [0, 32], sizes = [8, 32], strides = [1, 1]} : vector<8x128xf32> to vector<8x32xf32>
    %162 = vector.extract_strided_slice %159 {offsets = [0, 64], sizes = [8, 32], strides = [1, 1]} : vector<8x128xf32> to vector<8x32xf32>
    %163 = vector.extract_strided_slice %158 {offsets = [0, 96], sizes = [8, 32], strides = [1, 1]} : vector<8x128xf32> to vector<8x32xf32>
    %164 = arith.mulf %161, %128 : vector<8x32xf32>
    %165 = arith.mulf %160, %162 : vector<8x32xf32>
    %166 = arith.addf %164, %165 : vector<8x32xf32>
    %167 = math.tanh %166 : vector<8x32xf32>
    %168 = arith.mulf %163, %167 : vector<8x32xf32>
    %c32 = arith.constant 32 : index
    %c0_42 = arith.constant 0 : index
    %169 = vector.load %arg3[%c32, %c0_42] : memref<64x128xf32, #tpu.memory_space<vmem>>, vector<8x128xf32>
    %cst_43 = arith.constant dense<0.000000e+00> : vector<8x128xf32>
    %170 = tpu.matmul %148, %2, %cst_43 {dimension_numbers = #tpu.dot_dimension_numbers<[1], [0], [0], [1], [0, 0, 1, 1], [], []>} : vector<8x32xf32>, vector<32x128xf32>, vector<8x128xf32> -> vector<8x128xf32>
    %171 = arith.addf %169, %170 : vector<8x128xf32>
    %172 = arith.negf %171 : vector<8x128xf32>
    %173 = math.exp %172 : vector<8x128xf32>
    %cst_44 = arith.constant 1.000000e+00 : f32
    %174 = vector.broadcast %cst_44 : f32 to vector<8x128xf32>
    %175 = arith.addf %174, %173 : vector<8x128xf32>
    %176 = arith.divf %174, %175 : vector<8x128xf32>
    %177 = math.tanh %171 : vector<8x128xf32>
    %178 = vector.extract_strided_slice %176 {offsets = [0, 0], sizes = [8, 32], strides = [1, 1]} : vector<8x128xf32> to vector<8x32xf32>
    %179 = vector.extract_strided_slice %176 {offsets = [0, 32], sizes = [8, 32], strides = [1, 1]} : vector<8x128xf32> to vector<8x32xf32>
    %180 = vector.extract_strided_slice %177 {offsets = [0, 64], sizes = [8, 32], strides = [1, 1]} : vector<8x128xf32> to vector<8x32xf32>
    %181 = vector.extract_strided_slice %176 {offsets = [0, 96], sizes = [8, 32], strides = [1, 1]} : vector<8x128xf32> to vector<8x32xf32>
    %182 = arith.mulf %179, %146 : vector<8x32xf32>
    %183 = arith.mulf %178, %180 : vector<8x32xf32>
    %184 = arith.addf %182, %183 : vector<8x32xf32>
    %185 = math.tanh %184 : vector<8x32xf32>
    %186 = arith.mulf %181, %185 : vector<8x32xf32>
    %cst_45 = arith.constant dense<0.000000e+00> : vector<8x128xf32>
    %187 = tpu.matmul %186, %1, %cst_45 {dimension_numbers = #tpu.dot_dimension_numbers<[1], [0], [0], [1], [0, 0, 1, 1], [], []>} : vector<8x32xf32>, vector<32x128xf32>, vector<8x128xf32> -> vector<8x128xf32>
    %cst_46 = arith.constant dense<0.000000e+00> : vector<8x128xf32>
    %188 = tpu.matmul %168, %3, %cst_46 {dimension_numbers = #tpu.dot_dimension_numbers<[1], [0], [0], [1], [0, 0, 1, 1], [], []>} : vector<8x32xf32>, vector<32x128xf32>, vector<8x128xf32> -> vector<8x128xf32>
    %189 = arith.addf %187, %188 : vector<8x128xf32>
    %190 = vector.broadcast %5 : vector<1x128xf32> to vector<8x128xf32>
    %191 = arith.addf %189, %190 : vector<8x128xf32>
    %192 = arith.negf %191 : vector<8x128xf32>
    %193 = math.exp %192 : vector<8x128xf32>
    %cst_47 = arith.constant 1.000000e+00 : f32
    %194 = vector.broadcast %cst_47 : f32 to vector<8x128xf32>
    %195 = arith.addf %194, %193 : vector<8x128xf32>
    %196 = arith.divf %194, %195 : vector<8x128xf32>
    %197 = math.tanh %191 : vector<8x128xf32>
    %198 = vector.extract_strided_slice %196 {offsets = [0, 0], sizes = [8, 32], strides = [1, 1]} : vector<8x128xf32> to vector<8x32xf32>
    %199 = vector.extract_strided_slice %196 {offsets = [0, 32], sizes = [8, 32], strides = [1, 1]} : vector<8x128xf32> to vector<8x32xf32>
    %200 = vector.extract_strided_slice %197 {offsets = [0, 64], sizes = [8, 32], strides = [1, 1]} : vector<8x128xf32> to vector<8x32xf32>
    %201 = vector.extract_strided_slice %196 {offsets = [0, 96], sizes = [8, 32], strides = [1, 1]} : vector<8x128xf32> to vector<8x32xf32>
    %202 = arith.mulf %199, %166 : vector<8x32xf32>
    %203 = arith.mulf %198, %200 : vector<8x32xf32>
    %204 = arith.addf %202, %203 : vector<8x32xf32>
    %205 = math.tanh %204 : vector<8x32xf32>
    %206 = arith.mulf %201, %205 : vector<8x32xf32>
    %c40_48 = arith.constant 40 : index
    %c0_49 = arith.constant 0 : index
    %207 = vector.load %arg3[%c40_48, %c0_49] : memref<64x128xf32, #tpu.memory_space<vmem>>, vector<8x128xf32>
    %cst_50 = arith.constant dense<0.000000e+00> : vector<8x128xf32>
    %208 = tpu.matmul %186, %2, %cst_50 {dimension_numbers = #tpu.dot_dimension_numbers<[1], [0], [0], [1], [0, 0, 1, 1], [], []>} : vector<8x32xf32>, vector<32x128xf32>, vector<8x128xf32> -> vector<8x128xf32>
    %209 = arith.addf %207, %208 : vector<8x128xf32>
    %210 = arith.negf %209 : vector<8x128xf32>
    %211 = math.exp %210 : vector<8x128xf32>
    %cst_51 = arith.constant 1.000000e+00 : f32
    %212 = vector.broadcast %cst_51 : f32 to vector<8x128xf32>
    %213 = arith.addf %212, %211 : vector<8x128xf32>
    %214 = arith.divf %212, %213 : vector<8x128xf32>
    %215 = math.tanh %209 : vector<8x128xf32>
    %216 = vector.extract_strided_slice %214 {offsets = [0, 0], sizes = [8, 32], strides = [1, 1]} : vector<8x128xf32> to vector<8x32xf32>
    %217 = vector.extract_strided_slice %214 {offsets = [0, 32], sizes = [8, 32], strides = [1, 1]} : vector<8x128xf32> to vector<8x32xf32>
    %218 = vector.extract_strided_slice %215 {offsets = [0, 64], sizes = [8, 32], strides = [1, 1]} : vector<8x128xf32> to vector<8x32xf32>
    %219 = vector.extract_strided_slice %214 {offsets = [0, 96], sizes = [8, 32], strides = [1, 1]} : vector<8x128xf32> to vector<8x32xf32>
    %220 = arith.mulf %217, %184 : vector<8x32xf32>
    %221 = arith.mulf %216, %218 : vector<8x32xf32>
    %222 = arith.addf %220, %221 : vector<8x32xf32>
    %223 = math.tanh %222 : vector<8x32xf32>
    %224 = arith.mulf %219, %223 : vector<8x32xf32>
    %cst_52 = arith.constant dense<0.000000e+00> : vector<8x128xf32>
    %225 = tpu.matmul %224, %1, %cst_52 {dimension_numbers = #tpu.dot_dimension_numbers<[1], [0], [0], [1], [0, 0, 1, 1], [], []>} : vector<8x32xf32>, vector<32x128xf32>, vector<8x128xf32> -> vector<8x128xf32>
    %cst_53 = arith.constant dense<0.000000e+00> : vector<8x128xf32>
    %226 = tpu.matmul %206, %3, %cst_53 {dimension_numbers = #tpu.dot_dimension_numbers<[1], [0], [0], [1], [0, 0, 1, 1], [], []>} : vector<8x32xf32>, vector<32x128xf32>, vector<8x128xf32> -> vector<8x128xf32>
    %227 = arith.addf %225, %226 : vector<8x128xf32>
    %228 = vector.broadcast %5 : vector<1x128xf32> to vector<8x128xf32>
    %229 = arith.addf %227, %228 : vector<8x128xf32>
    %230 = arith.negf %229 : vector<8x128xf32>
    %231 = math.exp %230 : vector<8x128xf32>
    %cst_54 = arith.constant 1.000000e+00 : f32
    %232 = vector.broadcast %cst_54 : f32 to vector<8x128xf32>
    %233 = arith.addf %232, %231 : vector<8x128xf32>
    %234 = arith.divf %232, %233 : vector<8x128xf32>
    %235 = math.tanh %229 : vector<8x128xf32>
    %236 = vector.extract_strided_slice %234 {offsets = [0, 0], sizes = [8, 32], strides = [1, 1]} : vector<8x128xf32> to vector<8x32xf32>
    %237 = vector.extract_strided_slice %234 {offsets = [0, 32], sizes = [8, 32], strides = [1, 1]} : vector<8x128xf32> to vector<8x32xf32>
    %238 = vector.extract_strided_slice %235 {offsets = [0, 64], sizes = [8, 32], strides = [1, 1]} : vector<8x128xf32> to vector<8x32xf32>
    %239 = vector.extract_strided_slice %234 {offsets = [0, 96], sizes = [8, 32], strides = [1, 1]} : vector<8x128xf32> to vector<8x32xf32>
    %240 = arith.mulf %237, %204 : vector<8x32xf32>
    %241 = arith.mulf %236, %238 : vector<8x32xf32>
    %242 = arith.addf %240, %241 : vector<8x32xf32>
    %243 = math.tanh %242 : vector<8x32xf32>
    %244 = arith.mulf %239, %243 : vector<8x32xf32>
    %c48_55 = arith.constant 48 : index
    %c0_56 = arith.constant 0 : index
    %245 = vector.load %arg3[%c48_55, %c0_56] : memref<64x128xf32, #tpu.memory_space<vmem>>, vector<8x128xf32>
    %cst_57 = arith.constant dense<0.000000e+00> : vector<8x128xf32>
    %246 = tpu.matmul %224, %2, %cst_57 {dimension_numbers = #tpu.dot_dimension_numbers<[1], [0], [0], [1], [0, 0, 1, 1], [], []>} : vector<8x32xf32>, vector<32x128xf32>, vector<8x128xf32> -> vector<8x128xf32>
    %247 = arith.addf %245, %246 : vector<8x128xf32>
    %248 = arith.negf %247 : vector<8x128xf32>
    %249 = math.exp %248 : vector<8x128xf32>
    %cst_58 = arith.constant 1.000000e+00 : f32
    %250 = vector.broadcast %cst_58 : f32 to vector<8x128xf32>
    %251 = arith.addf %250, %249 : vector<8x128xf32>
    %252 = arith.divf %250, %251 : vector<8x128xf32>
    %253 = math.tanh %247 : vector<8x128xf32>
    %254 = vector.extract_strided_slice %252 {offsets = [0, 0], sizes = [8, 32], strides = [1, 1]} : vector<8x128xf32> to vector<8x32xf32>
    %255 = vector.extract_strided_slice %252 {offsets = [0, 32], sizes = [8, 32], strides = [1, 1]} : vector<8x128xf32> to vector<8x32xf32>
    %256 = vector.extract_strided_slice %253 {offsets = [0, 64], sizes = [8, 32], strides = [1, 1]} : vector<8x128xf32> to vector<8x32xf32>
    %257 = vector.extract_strided_slice %252 {offsets = [0, 96], sizes = [8, 32], strides = [1, 1]} : vector<8x128xf32> to vector<8x32xf32>
    %258 = arith.mulf %255, %222 : vector<8x32xf32>
    %259 = arith.mulf %254, %256 : vector<8x32xf32>
    %260 = arith.addf %258, %259 : vector<8x32xf32>
    %261 = math.tanh %260 : vector<8x32xf32>
    %262 = arith.mulf %257, %261 : vector<8x32xf32>
    %cst_59 = arith.constant dense<0.000000e+00> : vector<8x128xf32>
    %263 = tpu.matmul %262, %1, %cst_59 {dimension_numbers = #tpu.dot_dimension_numbers<[1], [0], [0], [1], [0, 0, 1, 1], [], []>} : vector<8x32xf32>, vector<32x128xf32>, vector<8x128xf32> -> vector<8x128xf32>
    %cst_60 = arith.constant dense<0.000000e+00> : vector<8x128xf32>
    %264 = tpu.matmul %244, %3, %cst_60 {dimension_numbers = #tpu.dot_dimension_numbers<[1], [0], [0], [1], [0, 0, 1, 1], [], []>} : vector<8x32xf32>, vector<32x128xf32>, vector<8x128xf32> -> vector<8x128xf32>
    %265 = arith.addf %263, %264 : vector<8x128xf32>
    %266 = vector.broadcast %5 : vector<1x128xf32> to vector<8x128xf32>
    %267 = arith.addf %265, %266 : vector<8x128xf32>
    %268 = arith.negf %267 : vector<8x128xf32>
    %269 = math.exp %268 : vector<8x128xf32>
    %cst_61 = arith.constant 1.000000e+00 : f32
    %270 = vector.broadcast %cst_61 : f32 to vector<8x128xf32>
    %271 = arith.addf %270, %269 : vector<8x128xf32>
    %272 = arith.divf %270, %271 : vector<8x128xf32>
    %273 = math.tanh %267 : vector<8x128xf32>
    %274 = vector.extract_strided_slice %272 {offsets = [0, 0], sizes = [8, 32], strides = [1, 1]} : vector<8x128xf32> to vector<8x32xf32>
    %275 = vector.extract_strided_slice %272 {offsets = [0, 32], sizes = [8, 32], strides = [1, 1]} : vector<8x128xf32> to vector<8x32xf32>
    %276 = vector.extract_strided_slice %273 {offsets = [0, 64], sizes = [8, 32], strides = [1, 1]} : vector<8x128xf32> to vector<8x32xf32>
    %277 = vector.extract_strided_slice %272 {offsets = [0, 96], sizes = [8, 32], strides = [1, 1]} : vector<8x128xf32> to vector<8x32xf32>
    %278 = arith.mulf %275, %242 : vector<8x32xf32>
    %279 = arith.mulf %274, %276 : vector<8x32xf32>
    %280 = arith.addf %278, %279 : vector<8x32xf32>
    %281 = math.tanh %280 : vector<8x32xf32>
    %282 = arith.mulf %277, %281 : vector<8x32xf32>
    %c56 = arith.constant 56 : index
    %c0_62 = arith.constant 0 : index
    %283 = vector.load %arg3[%c56, %c0_62] : memref<64x128xf32, #tpu.memory_space<vmem>>, vector<8x128xf32>
    %cst_63 = arith.constant dense<0.000000e+00> : vector<8x128xf32>
    %284 = tpu.matmul %262, %2, %cst_63 {dimension_numbers = #tpu.dot_dimension_numbers<[1], [0], [0], [1], [0, 0, 1, 1], [], []>} : vector<8x32xf32>, vector<32x128xf32>, vector<8x128xf32> -> vector<8x128xf32>
    %285 = arith.addf %283, %284 : vector<8x128xf32>
    %286 = arith.negf %285 : vector<8x128xf32>
    %287 = math.exp %286 : vector<8x128xf32>
    %cst_64 = arith.constant 1.000000e+00 : f32
    %288 = vector.broadcast %cst_64 : f32 to vector<8x128xf32>
    %289 = arith.addf %288, %287 : vector<8x128xf32>
    %290 = arith.divf %288, %289 : vector<8x128xf32>
    %291 = math.tanh %285 : vector<8x128xf32>
    %292 = vector.extract_strided_slice %290 {offsets = [0, 0], sizes = [8, 32], strides = [1, 1]} : vector<8x128xf32> to vector<8x32xf32>
    %293 = vector.extract_strided_slice %290 {offsets = [0, 32], sizes = [8, 32], strides = [1, 1]} : vector<8x128xf32> to vector<8x32xf32>
    %294 = vector.extract_strided_slice %291 {offsets = [0, 64], sizes = [8, 32], strides = [1, 1]} : vector<8x128xf32> to vector<8x32xf32>
    %295 = vector.extract_strided_slice %290 {offsets = [0, 96], sizes = [8, 32], strides = [1, 1]} : vector<8x128xf32> to vector<8x32xf32>
    %296 = arith.mulf %293, %260 : vector<8x32xf32>
    %297 = arith.mulf %292, %294 : vector<8x32xf32>
    %298 = arith.addf %296, %297 : vector<8x32xf32>
    %299 = math.tanh %298 : vector<8x32xf32>
    %300 = arith.mulf %295, %299 : vector<8x32xf32>
    %cst_65 = arith.constant dense<0.000000e+00> : vector<8x128xf32>
    %301 = tpu.matmul %300, %1, %cst_65 {dimension_numbers = #tpu.dot_dimension_numbers<[1], [0], [0], [1], [0, 0, 1, 1], [], []>} : vector<8x32xf32>, vector<32x128xf32>, vector<8x128xf32> -> vector<8x128xf32>
    %cst_66 = arith.constant dense<0.000000e+00> : vector<8x128xf32>
    %302 = tpu.matmul %282, %3, %cst_66 {dimension_numbers = #tpu.dot_dimension_numbers<[1], [0], [0], [1], [0, 0, 1, 1], [], []>} : vector<8x32xf32>, vector<32x128xf32>, vector<8x128xf32> -> vector<8x128xf32>
    %303 = arith.addf %301, %302 : vector<8x128xf32>
    %304 = vector.broadcast %5 : vector<1x128xf32> to vector<8x128xf32>
    %305 = arith.addf %303, %304 : vector<8x128xf32>
    %306 = arith.negf %305 : vector<8x128xf32>
    %307 = math.exp %306 : vector<8x128xf32>
    %cst_67 = arith.constant 1.000000e+00 : f32
    %308 = vector.broadcast %cst_67 : f32 to vector<8x128xf32>
    %309 = arith.addf %308, %307 : vector<8x128xf32>
    %310 = arith.divf %308, %309 : vector<8x128xf32>
    %311 = math.tanh %305 : vector<8x128xf32>
    %312 = vector.extract_strided_slice %310 {offsets = [0, 0], sizes = [8, 32], strides = [1, 1]} : vector<8x128xf32> to vector<8x32xf32>
    %313 = vector.extract_strided_slice %310 {offsets = [0, 32], sizes = [8, 32], strides = [1, 1]} : vector<8x128xf32> to vector<8x32xf32>
    %314 = vector.extract_strided_slice %311 {offsets = [0, 64], sizes = [8, 32], strides = [1, 1]} : vector<8x128xf32> to vector<8x32xf32>
    %315 = vector.extract_strided_slice %310 {offsets = [0, 96], sizes = [8, 32], strides = [1, 1]} : vector<8x128xf32> to vector<8x32xf32>
    %316 = arith.mulf %313, %280 : vector<8x32xf32>
    %317 = arith.mulf %312, %314 : vector<8x32xf32>
    %318 = arith.addf %316, %317 : vector<8x32xf32>
    %319 = math.tanh %318 : vector<8x32xf32>
    %320 = arith.mulf %315, %319 : vector<8x32xf32>
    %321 = vector.broadcast %6 : vector<1x32xf32> to vector<8x32xf32>
    %322 = arith.mulf %320, %321 : vector<8x32xf32>
    %cst_68 = arith.constant dense<0.000000e+00> : vector<8xf32>
    %323 = vector.multi_reduction <add>, %322, %cst_68 [1] : vector<8x32xf32> to vector<8xf32>
    %324 = vector.shape_cast %323 : vector<8xf32> to vector<8x1xf32>
    %325 = vector.broadcast %7 : vector<1x1xf32> to vector<8x1xf32>
    %326 = arith.addf %324, %325 : vector<8x1xf32>
    %c0_69 = arith.constant 0 : index
    %c0_70 = arith.constant 0 : index
    %327 = vector.load %arg2[%c0_69, %c0_70] : memref<8x1xf32, #tpu.memory_space<vmem>>, vector<8x1xf32>
    tpu.vector_store %arg2[%c0_69, %c0_70], %326 {strides = array<i32>} : memref<8x1xf32, #tpu.memory_space<vmem>>, vector<8x1xf32>,
    return
  }
}

</mosaic_0001>

<llo_original>
// kernel: tpu_custom_call.1
$region0: #{tpu_custom_call.1}
  #allocation0 [shape = 'u32[]', space=smem, size = 0x4, offset = 0x4, fixed_abs, tag = 'smem constant byte address 0x4 - core index']
  #allocation1 [shape = 'u32[72,128]{1,0:T(1,128)}', space=vmem, size = 0x9000, scoped, tag = 'internal scratch']
  #allocation2 [shape = 'f32[64,128]{1,0:T(8,128)}', space=vmem, size = 0x8000, scoped, tag = 'scratch operand']
  %s0 = inlined_call_operand.vmem [shape: f32[64,4], index: 0, kind: input, shape index: {}]
  %s1 = inlined_call_operand.hbm [shape: f32[136,128], index: 1, kind: input, shape index: {}]
  %s2 = inlined_call_operand.vmem [shape: f32[8,1], index: 2, kind: output, shape index: {}]
  %s3 = sld [smem:[#allocation0]]
  $region22: #{tpu_custom_call.1} parent=0
    _
  %s5 = ssub.s32 1, %s3
  %s6 = scalar_select 0, %s5, %s3
  $region1: #{tpu_custom_call.1} parent=0
    #allocation3 [shape = 'u8[69632]{0}', space=vmem, size = 0x11000, scoped, tag = 'input window, operand 1, single buffered']
    #allocation4 [shape = 's32[1]{0}', space=sflag, size = 0x4, scoped, tag = 'scoped memory for tpu_custom_call.1']
    %7 = vsyncpa [#allocation4], 0
    // Predicated region
    $region2: #{tpu_custom_call.1} parent=1 // pred_check
      _
    $region3: #{tpu_custom_call.1} parent=1 // pred_check_branch
      %9 = sbr.rel (0) target = $region5
    $region4: #{tpu_custom_call.1} parent=1 // pred_region
      _
    $region5: #{tpu_custom_call.1} parent=1 // pred_fallthru
      _
    // Predicated region
    $region6: #{tpu_custom_call.1} parent=1 // pred_check
      _
    $region7: #{tpu_custom_call.1} parent=1 // pred_check_branch
      %11 = sbr.rel (0) target = $region9
    $region8: #{tpu_custom_call.1} parent=1 // pred_region
      %13 = vsyncadd [#allocation4], 0
      %s14 = sshll.u32 %s1, 4
      %s15 = int_to_ptr.hbm [resolvable:$true] %s14
      %s16 = sshll.u32 [#allocation3], 4
      %s17 = int_to_ptr.vmem [resolvable:$true] %s16
      %22 = dma.hbm_to_vmem [thread:$0]  %s15, 2176, %s17, [#allocation4], 128, 128, 8
    $region9: #{tpu_custom_call.1} parent=1 // pred_fallthru
      _
    // Predicated region
    $region10: #{tpu_custom_call.1} parent=1 // pred_check
      _
    $region11: #{tpu_custom_call.1} parent=1 // pred_check_branch
      %24 = sbr.rel (0) target = $region13
    $region12: #{tpu_custom_call.1} parent=1 // pred_region
      %26 = dma.done [#allocation4], 2176
    $region13: #{tpu_custom_call.1} parent=1 // pred_fallthru
      _
    %v27 = vld [vmem:[#allocation3] sm:$0xf]
    %v28 = vld [vmem:[#allocation3 + $0x30] sm:$0xff]
    %v29 = vld [vmem:[#allocation3 + $0x38] sm:$0xff]
    %v30 = vld [vmem:[#allocation3 + $0x40] sm:$0xff]
    %v31 = vld [vmem:[#allocation3 + $0x48] sm:$0xff]
    %v32 = vld [vmem:[#allocation3 + $0x8] sm:$0xff]
    %v33 = vld [vmem:[#allocation3 + $0x10] sm:$0xff]
    %v34 = vld [vmem:[#allocation3 + $0x18] sm:$0xff]
    %v35 = vld [vmem:[#allocation3 + $0x20] sm:$0xff]
    %v36 = vld [vmem:[#allocation3 + $0x50] sm:$0xff]
    %v37 = vld [vmem:[#allocation3 + $0x58] sm:$0xff]
    %v38 = vld [vmem:[#allocation3 + $0x60] sm:$0xff]
    %v39 = vld [vmem:[#allocation3 + $0x68] sm:$0xff]
    %v40 = vld [vmem:[#allocation3 + $0x28] sm:$0x1]
    %v41 = vld [vmem:[#allocation3 + $0x70] sm:$0x1]
    %v42 = vld [vmem:[#allocation3 + $0x78] sm:$0x1]
    %v43 = vld [vmem:[#allocation3 + $0x80] sm:$0x1]
    %v44 = vld [vmem:[%s0] sm:$0xff]
    %v45 = vld [vmem:[%s0 + $0x8] sm:$0xff]
    %v46 = vld [vmem:[%s0 + $0x10] sm:$0xff]
    %v47 = vld [vmem:[%s0 + $0x18] sm:$0xff]
    %v48 = vld [vmem:[%s0 + $0x20] sm:$0xff]
    %v49 = vld [vmem:[%s0 + $0x28] sm:$0xff]
    %v50 = vld [vmem:[%s0 + $0x30] sm:$0xff]
    %v51 = vld [vmem:[%s0 + $0x38] sm:$0xff]
    %v52 = vperm.slane %v40, 0
    %vm53 = vcmask 31744
    %v55 = vsel %vm53, %v44, 0
    %v58 = vsel %vm53, %v45, 0
    %v61 = vsel %vm53, %v46, 0
    %v64 = vsel %vm53, %v47, 0
    %v67 = vsel %vm53, %v48, 0
    %v70 = vsel %vm53, %v49, 0
    %v73 = vsel %vm53, %v50, 0
    %v76 = vsel %vm53, %v51, 0
    %vm78 = vcmask 1043456
    %v80 = vsel %vm78, %v27, 0
    %82 = vmatpush.msra.mxu0 0.0
    %83 = vmatpush.msra.mxu0 0.0
    %84 = vmatpush.msra.mxu0 0.0
    %85 = vmatpush.msra.mxu0 0.0
    %86 = vmatpush.msra.mxu0 0.0
    %87 = vmatpush.msra.mxu0 0.0
    %88 = vmatpush.msra.mxu0 0.0
    %89 = vmatpush.msra.mxu0 0.0
    %90 = vmatpush.msra.mxu0 0.0
    %91 = vmatpush.msra.mxu0 0.0
    %92 = vmatpush.msra.mxu0 0.0
    %93 = vmatpush.msra.mxu0 0.0
    %94 = vmatpush.msra.mxu0 0.0
    %95 = vmatpush.msra.mxu0 0.0
    %96 = vmatpush.msra.mxu0 0.0
    %97 = vmatpush.msra.mxu0 %v80
    %98 = vmatmul.f32.gmra.mxu0 %v55
    %v99 = vpop.f32.mrf.mxu0
    %v100 = vadd.f32 %v52, %v99
    %101 = vmatmul.f32.gmra.mxu0 %v58
    %v102 = vpop.f32.mrf.mxu0
    %v103 = vadd.f32 %v52, %v102
    %104 = vmatmul.f32.gmra.mxu0 %v61
    %v105 = vpop.f32.mrf.mxu0
    %v106 = vadd.f32 %v52, %v105
    %107 = vmatmul.f32.gmra.mxu0 %v64
    %v108 = vpop.f32.mrf.mxu0
    %v109 = vadd.f32 %v52, %v108
    %110 = vmatmul.f32.gmra.mxu0 %v67
    %v111 = vpop.f32.mrf.mxu0
    %v112 = vadd.f32 %v52, %v111
    %113 = vmatmul.f32.gmra.mxu0 %v70
    %v114 = vpop.f32.mrf.mxu0
    %v115 = vadd.f32 %v52, %v114
    %116 = vmatmul.f32.gmra.mxu0 %v73
    %v117 = vpop.f32.mrf.mxu0
    %v118 = vadd.f32 %v52, %v117
    %119 = vmatmul.f32.gmra.mxu0 %v76
    %v120 = vpop.f32.mrf.mxu0
    %v121 = vadd.f32 %v52, %v120
    %122 = vdwg.mxu0
    %123 = vst [vmem:[#allocation2] sm:$0xff] %v100
    %124 = vst [vmem:[#allocation2 + $0x8] sm:$0xff] %v103
    %125 = vst [vmem:[#allocation2 + $0x10] sm:$0xff] %v106
    %126 = vst [vmem:[#allocation2 + $0x18] sm:$0xff] %v109
    %127 = vst [vmem:[#allocation2 + $0x20] sm:$0xff] %v112
    %128 = vst [vmem:[#allocation2 + $0x28] sm:$0xff] %v115
    %129 = vst [vmem:[#allocation2 + $0x30] sm:$0xff] %v118
    %130 = vst [vmem:[#allocation2 + $0x38] sm:$0xff] %v121
    %v131 = vld [vmem:[#allocation2] sm:$0xff]
    %vm132 = vcmask 261120
    %v134 = vsel %vm132, 0.0, 0
    %136 = vmatpush.msra.mxu0 0.0
    %137 = vmatpush.msra.mxu0 0.0
    %138 = vmatpush.msra.mxu0 0.0
    %139 = vmatpush.msra.mxu0 0.0
    %140 = vmatpush.msra.mxu0 0.0
    %141 = vmatpush.msra.mxu0 0.0
    %142 = vmatpush.msra.mxu0 0.0
    %143 = vmatpush.msra.mxu0 0.0
    %144 = vmatpush.msra.mxu0 0.0
    %145 = vmatpush.msra.mxu0 0.0
    %146 = vmatpush.msra.mxu0 0.0
    %147 = vmatpush.msra.mxu0 0.0
    %148 = vmatpush.msra.mxu0 %v35
    %149 = vmatpush.msra.mxu0 %v34
    %150 = vmatpush.msra.mxu0 %v33
    %151 = vmatpush.msra.mxu0 %v32
    %152 = vmatmul.f32.gmra.mxu0 %v134
    %v153 = vpop.f32.mrf.mxu0
    %v154 = vadd.f32 0.0, %v153
    %155 = vdwg.mxu0
    %v156 = vadd.f32 %v131, %v154
    %v157 = vxor.u32 %v156, 2147483648
    %v158 = vmul.f32 %v157, 1.442695
    %v159 = vpow.pop %v158
    %v160 = vadd.f32 %v159, 1.0
    %v161 = vrcp.pop %v160
    %v162 = vmul.f32 %v160, %v161
    %v163 = vsub.f32 1.0, %v162
    %v164 = vmul.f32 %v161, %v163
    %v165 = vadd.f32 %v161, %v164
    %vm166 = vweird.f32 %v160
    %vm167 = vweird.f32 %v161
    %vm168 = vmor %vm166, %vm167
    %v169 = vsel %vm168, %v161, %v165
    %v170 = vand.u32 2147483647, %v160
    %vm171 = vcmp.eq.f32.partialorder %v170, 8.507059e+37
    %v172 = vand.u32 %v160, 2147483648
    %v173 = vor.u32 1.1754944e-38, %v172
    %v174 = vsel %vm171, %v173, %v169
    %v175 = vmul.f32 1.0, %v174
    %v176 = vtanh.pop %v156
    %v177 = vmul.f32 %v175, 0.0
    %179 = vrot.lane.b32.xlu0 %v176, 64
    %v180 = vpop.permute.xlu0 %179
    %v182 = vmul.f32 %v175, %v180
    %184 = vrot.lane.b32.xlu0 %v182, 32
    %v185 = vpop.permute.xlu0 %184
    %v187 = vadd.f32 %v177, %v185
    %v188 = vtanh.pop %v187
    %190 = vrot.lane.b32.xlu0 %v188, 64
    %v191 = vpop.permute.xlu0 %190
    %v193 = vmul.f32 %v175, %v191
    %194 = vmatpush.msra.mxu0 0.0
    %195 = vmatpush.msra.mxu0 0.0
    %196 = vmatpush.msra.mxu0 0.0
    %197 = vmatpush.msra.mxu0 0.0
    %198 = vmatpush.msra.mxu0 0.0
    %199 = vmatpush.msra.mxu0 0.0
    %200 = vmatpush.msra.mxu0 0.0
    %201 = vmatpush.msra.mxu0 0.0
    %202 = vmatpush.msra.mxu0 0.0
    %203 = vmatpush.msra.mxu0 0.0
    %204 = vmatpush.msra.mxu0 0.0
    %205 = vmatpush.msra.mxu0 0.0
    %206 = vmatpush.msra.mxu0 %v39
    %207 = vmatpush.msra.mxu0 %v38
    %208 = vmatpush.msra.mxu0 %v37
    %209 = vmatpush.msra.mxu0 %v36
    %210 = vmatmul.f32.gmra.mxu0 %v134
    %v211 = vpop.f32.mrf.mxu0
    %v212 = vadd.f32 0.0, %v211
    %213 = vdwg.mxu0
    %215 = vrot.lane.b32.xlu0 %v193, 32
    %v216 = vpop.permute.xlu0 %215
    %v217 = vsel %vm132, %v216, 0
    %219 = vmatpush.msra.mxu0 0.0
    %220 = vmatpush.msra.mxu0 0.0
    %221 = vmatpush.msra.mxu0 0.0
    %222 = vmatpush.msra.mxu0 0.0
    %223 = vmatpush.msra.mxu0 0.0
    %224 = vmatpush.msra.mxu0 0.0
    %225 = vmatpush.msra.mxu0 0.0
    %226 = vmatpush.msra.mxu0 0.0
    %227 = vmatpush.msra.mxu0 0.0
    %228 = vmatpush.msra.mxu0 0.0
    %229 = vmatpush.msra.mxu0 0.0
    %230 = vmatpush.msra.mxu0 0.0
    %231 = vmatpush.msra.mxu0 %v31
    %232 = vmatpush.msra.mxu0 %v30
    %233 = vmatpush.msra.mxu0 %v29
    %234 = vmatpush.msra.mxu0 %v28
    %235 = vmatmul.f32.gmra.mxu0 %v217
    %v236 = vpop.f32.mrf.mxu0
    %v237 = vadd.f32 %v212, %v236
    %238 = vdwg.mxu0
    %v239 = vperm.slane %v41, 0
    %v240 = vadd.f32 %v237, %v239
    %v241 = vxor.u32 %v240, 2147483648
    %v242 = vmul.f32 %v241, 1.442695
    %v243 = vpow.pop %v242
    %v244 = vadd.f32 %v243, 1.0
    %v245 = vrcp.pop %v244
    %v246 = vmul.f32 %v244, %v245
    %v247 = vsub.f32 1.0, %v246
    %v248 = vmul.f32 %v245, %v247
    %v249 = vadd.f32 %v245, %v248
    %vm250 = vweird.f32 %v244
    %vm251 = vweird.f32 %v245
    %vm252 = vmor %vm250, %vm251
    %v253 = vsel %vm252, %v245, %v249
    %v254 = vand.u32 2147483647, %v244
    %vm255 = vcmp.eq.f32.partialorder %v254, 8.507059e+37
    %v256 = vand.u32 %v244, 2147483648
    %v257 = vor.u32 1.1754944e-38, %v256
    %v258 = vsel %vm255, %v257, %v253
    %v259 = vmul.f32 1.0, %v258
    %v260 = vtanh.pop %v240
    %v261 = vmul.f32 %v259, 0.0
    %263 = vrot.lane.b32.xlu0 %v260, 64
    %v264 = vpop.permute.xlu0 %263
    %v266 = vmul.f32 %v259, %v264
    %268 = vrot.lane.b32.xlu0 %v266, 32
    %v269 = vpop.permute.xlu0 %268
    %v271 = vadd.f32 %v261, %v269
    %v272 = vtanh.pop %v271
    %274 = vrot.lane.b32.xlu0 %v272, 64
    %v275 = vpop.permute.xlu0 %274
    %v277 = vmul.f32 %v259, %v275
    %v278 = vld [vmem:[#allocation2 + $0x8] sm:$0xff]
    %279 = vmatpush.msra.mxu0 0.0
    %280 = vmatpush.msra.mxu0 0.0
    %281 = vmatpush.msra.mxu0 0.0
    %282 = vmatpush.msra.mxu0 0.0
    %283 = vmatpush.msra.mxu0 0.0
    %284 = vmatpush.msra.mxu0 0.0
    %285 = vmatpush.msra.mxu0 0.0
    %286 = vmatpush.msra.mxu0 0.0
    %287 = vmatpush.msra.mxu0 0.0
    %288 = vmatpush.msra.mxu0 0.0
    %289 = vmatpush.msra.mxu0 0.0
    %290 = vmatpush.msra.mxu0 0.0
    %291 = vmatpush.msra.mxu0 %v35
    %292 = vmatpush.msra.mxu0 %v34
    %293 = vmatpush.msra.mxu0 %v33
    %294 = vmatpush.msra.mxu0 %v32
    %295 = vmatmul.f32.gmra.mxu0 %v217
    %v296 = vpop.f32.mrf.mxu0
    %v297 = vadd.f32 0.0, %v296
    %298 = vdwg.mxu0
    %v299 = vadd.f32 %v278, %v297
    %v300 = vxor.u32 %v299, 2147483648
    %v301 = vmul.f32 %v300, 1.442695
    %v302 = vpow.pop %v301
    %v303 = vadd.f32 %v302, 1.0
    %v304 = vrcp.pop %v303
    %v305 = vmul.f32 %v303, %v304
    %v306 = vsub.f32 1.0, %v305
    %v307 = vmul.f32 %v304, %v306
    %v308 = vadd.f32 %v304, %v307
    %vm309 = vweird.f32 %v303
    %vm310 = vweird.f32 %v304
    %vm311 = vmor %vm309, %vm310
    %v312 = vsel %vm311, %v304, %v308
    %v313 = vand.u32 2147483647, %v303
    %vm314 = vcmp.eq.f32.partialorder %v313, 8.507059e+37
    %v315 = vand.u32 %v303, 2147483648
    %v316 = vor.u32 1.1754944e-38, %v315
    %v317 = vsel %vm314, %v316, %v312
    %v318 = vmul.f32 1.0, %v317
    %v319 = vtanh.pop %v299
    %v320 = vmul.f32 %v318, %v187
    %322 = vrot.lane.b32.xlu0 %v319, 64
    %v323 = vpop.permute.xlu0 %322
    %v325 = vmul.f32 %v318, %v323
    %327 = vrot.lane.b32.xlu0 %v325, 32
    %v328 = vpop.permute.xlu0 %327
    %v330 = vadd.f32 %v320, %v328
    %v331 = vtanh.pop %v330
    %333 = vrot.lane.b32.xlu0 %v331, 64
    %v334 = vpop.permute.xlu0 %333
    %v336 = vmul.f32 %v318, %v334
    %338 = vrot.lane.b32.xlu0 %v277, 32
    %v339 = vpop.permute.xlu0 %338
    %v340 = vsel %vm132, %v339, 0
    %342 = vmatpush.msra.mxu0 0.0
    %343 = vmatpush.msra.mxu0 0.0
    %344 = vmatpush.msra.mxu0 0.0
    %345 = vmatpush.msra.mxu0 0.0
    %346 = vmatpush.msra.mxu0 0.0
    %347 = vmatpush.msra.mxu0 0.0
    %348 = vmatpush.msra.mxu0 0.0
    %349 = vmatpush.msra.mxu0 0.0
    %350 = vmatpush.msra.mxu0 0.0
    %351 = vmatpush.msra.mxu0 0.0
    %352 = vmatpush.msra.mxu0 0.0
    %353 = vmatpush.msra.mxu0 0.0
    %354 = vmatpush.msra.mxu0 %v39
    %355 = vmatpush.msra.mxu0 %v38
    %356 = vmatpush.msra.mxu0 %v37
    %357 = vmatpush.msra.mxu0 %v36
    %358 = vmatmul.f32.gmra.mxu0 %v340
    %v359 = vpop.f32.mrf.mxu0
    %v360 = vadd.f32 0.0, %v359
    %361 = vdwg.mxu0
    %363 = vrot.lane.b32.xlu0 %v336, 32
    %v364 = vpop.permute.xlu0 %363
    %v365 = vsel %vm132, %v364, 0
    %367 = vmatpush.msra.mxu0 0.0
    %368 = vmatpush.msra.mxu0 0.0
    %369 = vmatpush.msra.mxu0 0.0
    %370 = vmatpush.msra.mxu0 0.0
    %371 = vmatpush.msra.mxu0 0.0
    %372 = vmatpush.msra.mxu0 0.0
    %373 = vmatpush.msra.mxu0 0.0
    %374 = vmatpush.msra.mxu0 0.0
    %375 = vmatpush.msra.mxu0 0.0
    %376 = vmatpush.msra.mxu0 0.0
    %377 = vmatpush.msra.mxu0 0.0
    %378 = vmatpush.msra.mxu0 0.0
    %379 = vmatpush.msra.mxu0 %v31
    %380 = vmatpush.msra.mxu0 %v30
    %381 = vmatpush.msra.mxu0 %v29
    %382 = vmatpush.msra.mxu0 %v28
    %383 = vmatmul.f32.gmra.mxu0 %v365
    %v384 = vpop.f32.mrf.mxu0
    %v385 = vadd.f32 %v360, %v384
    %386 = vdwg.mxu0
    %v387 = vadd.f32 %v385, %v239
    %v388 = vxor.u32 %v387, 2147483648
    %v389 = vmul.f32 %v388, 1.442695
    %v390 = vpow.pop %v389
    %v391 = vadd.f32 %v390, 1.0
    %v392 = vrcp.pop %v391
    %v393 = vmul.f32 %v391, %v392
    %v394 = vsub.f32 1.0, %v393
    %v395 = vmul.f32 %v392, %v394
    %v396 = vadd.f32 %v392, %v395
    %vm397 = vweird.f32 %v391
    %vm398 = vweird.f32 %v392
    %vm399 = vmor %vm397, %vm398
    %v400 = vsel %vm399, %v392, %v396
    %v401 = vand.u32 2147483647, %v391
    %vm402 = vcmp.eq.f32.partialorder %v401, 8.507059e+37
    %v403 = vand.u32 %v391, 2147483648
    %v404 = vor.u32 1.1754944e-38, %v403
    %v405 = vsel %vm402, %v404, %v400
    %v406 = vmul.f32 1.0, %v405
    %v407 = vtanh.pop %v387
    %v408 = vmul.f32 %v406, %v271
    %410 = vrot.lane.b32.xlu0 %v407, 64
    %v411 = vpop.permute.xlu0 %410
    %v413 = vmul.f32 %v406, %v411
    %415 = vrot.lane.b32.xlu0 %v413, 32
    %v416 = vpop.permute.xlu0 %415
    %v418 = vadd.f32 %v408, %v416
    %v419 = vtanh.pop %v418
    %421 = vrot.lane.b32.xlu0 %v419, 64
    %v422 = vpop.permute.xlu0 %421
    %v424 = vmul.f32 %v406, %v422
    %v425 = vld [vmem:[#allocation2 + $0x10] sm:$0xff]
    %426 = vmatpush.msra.mxu0 0.0
    %427 = vmatpush.msra.mxu0 0.0
    %428 = vmatpush.msra.mxu0 0.0
    %429 = vmatpush.msra.mxu0 0.0
    %430 = vmatpush.msra.mxu0 0.0
    %431 = vmatpush.msra.mxu0 0.0
    %432 = vmatpush.msra.mxu0 0.0
    %433 = vmatpush.msra.mxu0 0.0
    %434 = vmatpush.msra.mxu0 0.0
    %435 = vmatpush.msra.mxu0 0.0
    %436 = vmatpush.msra.mxu0 0.0
    %437 = vmatpush.msra.mxu0 0.0
    %438 = vmatpush.msra.mxu0 %v35
    %439 = vmatpush.msra.mxu0 %v34
    %440 = vmatpush.msra.mxu0 %v33
    %441 = vmatpush.msra.mxu0 %v32
    %442 = vmatmul.f32.gmra.mxu0 %v365
    %v443 = vpop.f32.mrf.mxu0
    %v444 = vadd.f32 0.0, %v443
    %445 = vdwg.mxu0
    %v446 = vadd.f32 %v425, %v444
    %v447 = vxor.u32 %v446, 2147483648
    %v448 = vmul.f32 %v447, 1.442695
    %v449 = vpow.pop %v448
    %v450 = vadd.f32 %v449, 1.0
    %v451 = vrcp.pop %v450
    %v452 = vmul.f32 %v450, %v451
    %v453 = vsub.f32 1.0, %v452
    %v454 = vmul.f32 %v451, %v453
    %v455 = vadd.f32 %v451, %v454
    %vm456 = vweird.f32 %v450
    %vm457 = vweird.f32 %v451
    %vm458 = vmor %vm456, %vm457
    %v459 = vsel %vm458, %v451, %v455
    %v460 = vand.u32 2147483647, %v450
    %vm461 = vcmp.eq.f32.partialorder %v460, 8.507059e+37
    %v462 = vand.u32 %v450, 2147483648
    %v463 = vor.u32 1.1754944e-38, %v462
    %v464 = vsel %vm461, %v463, %v459
    %v465 = vmul.f32 1.0, %v464
    %v466 = vtanh.pop %v446
    %v467 = vmul.f32 %v465, %v330
    %469 = vrot.lane.b32.xlu0 %v466, 64
    %v470 = vpop.permute.xlu0 %469
    %v472 = vmul.f32 %v465, %v470
    %474 = vrot.lane.b32.xlu0 %v472, 32
    %v475 = vpop.permute.xlu0 %474
    %v477 = vadd.f32 %v467, %v475
    %v478 = vtanh.pop %v477
    %480 = vrot.lane.b32.xlu0 %v478, 64
    %v481 = vpop.permute.xlu0 %480
    %v483 = vmul.f32 %v465, %v481
    %485 = vrot.lane.b32.xlu0 %v424, 32
    %v486 = vpop.permute.xlu0 %485
    %v487 = vsel %vm132, %v486, 0
    %489 = vmatpush.msra.mxu0 0.0
    %490 = vmatpush.msra.mxu0 0.0
    %491 = vmatpush.msra.mxu0 0.0
    %492 = vmatpush.msra.mxu0 0.0
    %493 = vmatpush.msra.mxu0 0.0
    %494 = vmatpush.msra.mxu0 0.0
    %495 = vmatpush.msra.mxu0 0.0
    %496 = vmatpush.msra.mxu0 0.0
    %497 = vmatpush.msra.mxu0 0.0
    %498 = vmatpush.msra.mxu0 0.0
    %499 = vmatpush.msra.mxu0 0.0
    %500 = vmatpush.msra.mxu0 0.0
    %501 = vmatpush.msra.mxu0 %v39
    %502 = vmatpush.msra.mxu0 %v38
    %503 = vmatpush.msra.mxu0 %v37
    %504 = vmatpush.msra.mxu0 %v36
    %505 = vmatmul.f32.gmra.mxu0 %v487
    %v506 = vpop.f32.mrf.mxu0
    %v507 = vadd.f32 0.0, %v506
    %508 = vdwg.mxu0
    %510 = vrot.lane.b32.xlu0 %v483, 32
    %v511 = vpop.permute.xlu0 %510
    %v512 = vsel %vm132, %v511, 0
    %514 = vmatpush.msra.mxu0 0.0
    %515 = vmatpush.msra.mxu0 0.0
    %516 = vmatpush.msra.mxu0 0.0
    %517 = vmatpush.msra.mxu0 0.0
    %518 = vmatpush.msra.mxu0 0.0
    %519 = vmatpush.msra.mxu0 0.0
    %520 = vmatpush.msra.mxu0 0.0
    %521 = vmatpush.msra.mxu0 0.0
    %522 = vmatpush.msra.mxu0 0.0
    %523 = vmatpush.msra.mxu0 0.0
    %524 = vmatpush.msra.mxu0 0.0
    %525 = vmatpush.msra.mxu0 0.0
    %526 = vmatpush.msra.mxu0 %v31
    %527 = vmatpush.msra.mxu0 %v30
    %528 = vmatpush.msra.mxu0 %v29
    %529 = vmatpush.msra.mxu0 %v28
    %530 = vmatmul.f32.gmra.mxu0 %v512
    %v531 = vpop.f32.mrf.mxu0
    %v532 = vadd.f32 %v507, %v531
    %533 = vdwg.mxu0
    %v534 = vadd.f32 %v532, %v239
    %v535 = vxor.u32 %v534, 2147483648
    %v536 = vmul.f32 %v535, 1.442695
    %v537 = vpow.pop %v536
    %v538 = vadd.f32 %v537, 1.0
    %v539 = vrcp.pop %v538
    %v540 = vmul.f32 %v538, %v539
    %v541 = vsub.f32 1.0, %v540
    %v542 = vmul.f32 %v539, %v541
    %v543 = vadd.f32 %v539, %v542
    %vm544 = vweird.f32 %v538
    %vm545 = vweird.f32 %v539
    %vm546 = vmor %vm544, %vm545
    %v547 = vsel %vm546, %v539, %v543
    %v548 = vand.u32 2147483647, %v538
    %vm549 = vcmp.eq.f32.partialorder %v548, 8.507059e+37
    %v550 = vand.u32 %v538, 2147483648
    %v551 = vor.u32 1.1754944e-38, %v550
    %v552 = vsel %vm549, %v551, %v547
    %v553 = vmul.f32 1.0, %v552
    %v554 = vtanh.pop %v534
    %v555 = vmul.f32 %v553, %v418
    %557 = vrot.lane.b32.xlu0 %v554, 64
    %v558 = vpop.permute.xlu0 %557
    %v560 = vmul.f32 %v553, %v558
    %562 = vrot.lane.b32.xlu0 %v560, 32
    %v563 = vpop.permute.xlu0 %562
    %v565 = vadd.f32 %v555, %v563
    %v566 = vtanh.pop %v565
    %568 = vrot.lane.b32.xlu0 %v566, 64
    %v569 = vpop.permute.xlu0 %568
    %v571 = vmul.f32 %v553, %v569
    %v572 = vld [vmem:[#allocation2 + $0x18] sm:$0xff]
    %573 = vmatpush.msra.mxu0 0.0
    %574 = vmatpush.msra.mxu0 0.0
    %575 = vmatpush.msra.mxu0 0.0
    %576 = vmatpush.msra.mxu0 0.0
    %577 = vmatpush.msra.mxu0 0.0
    %578 = vmatpush.msra.mxu0 0.0
    %579 = vmatpush.msra.mxu0 0.0
    %580 = vmatpush.msra.mxu0 0.0
    %581 = vmatpush.msra.mxu0 0.0
    %582 = vmatpush.msra.mxu0 0.0
    %583 = vmatpush.msra.mxu0 0.0
    %584 = vmatpush.msra.mxu0 0.0
    %585 = vmatpush.msra.mxu0 %v35
    %586 = vmatpush.msra.mxu0 %v34
    %587 = vmatpush.msra.mxu0 %v33
    %588 = vmatpush.msra.mxu0 %v32
    %589 = vmatmul.f32.gmra.mxu0 %v512
    %v590 = vpop.f32.mrf.mxu0
    %v591 = vadd.f32 0.0, %v590
    %592 = vdwg.mxu0
    %v593 = vadd.f32 %v572, %v591
    %v594 = vxor.u32 %v593, 2147483648
    %v595 = vmul.f32 %v594, 1.442695
    %v596 = vpow.pop %v595
    %v597 = vadd.f32 %v596, 1.0
    %v598 = vrcp.pop %v597
    %v599 = vmul.f32 %v597, %v598
    %v600 = vsub.f32 1.0, %v599
    %v601 = vmul.f32 %v598, %v600
    %v602 = vadd.f32 %v598, %v601
    %vm603 = vweird.f32 %v597
    %vm604 = vweird.f32 %v598
    %vm605 = vmor %vm603, %vm604
    %v606 = vsel %vm605, %v598, %v602
    %v607 = vand.u32 2147483647, %v597
    %vm608 = vcmp.eq.f32.partialorder %v607, 8.507059e+37
    %v609 = vand.u32 %v597, 2147483648
    %v610 = vor.u32 1.1754944e-38, %v609
    %v611 = vsel %vm608, %v610, %v606
    %v612 = vmul.f32 1.0, %v611
    %v613 = vtanh.pop %v593
    %v614 = vmul.f32 %v612, %v477
    %616 = vrot.lane.b32.xlu0 %v613, 64
    %v617 = vpop.permute.xlu0 %616
    %v619 = vmul.f32 %v612, %v617
    %621 = vrot.lane.b32.xlu0 %v619, 32
    %v622 = vpop.permute.xlu0 %621
    %v624 = vadd.f32 %v614, %v622
    %v625 = vtanh.pop %v624
    %627 = vrot.lane.b32.xlu0 %v625, 64
    %v628 = vpop.permute.xlu0 %627
    %v630 = vmul.f32 %v612, %v628
    %632 = vrot.lane.b32.xlu0 %v571, 32
    %v633 = vpop.permute.xlu0 %632
    %v634 = vsel %vm132, %v633, 0
    %636 = vmatpush.msra.mxu0 0.0
    %637 = vmatpush.msra.mxu0 0.0
    %638 = vmatpush.msra.mxu0 0.0
    %639 = vmatpush.msra.mxu0 0.0
    %640 = vmatpush.msra.mxu0 0.0
    %641 = vmatpush.msra.mxu0 0.0
    %642 = vmatpush.msra.mxu0 0.0
    %643 = vmatpush.msra.mxu0 0.0
    %644 = vmatpush.msra.mxu0 0.0
    %645 = vmatpush.msra.mxu0 0.0
    %646 = vmatpush.msra.mxu0 0.0
    %647 = vmatpush.msra.mxu0 0.0
    %648 = vmatpush.msra.mxu0 %v39
    %649 = vmatpush.msra.mxu0 %v38
    %650 = vmatpush.msra.mxu0 %v37
    %651 = vmatpush.msra.mxu0 %v36
    %652 = vmatmul.f32.gmra.mxu0 %v634
    %v653 = vpop.f32.mrf.mxu0
    %v654 = vadd.f32 0.0, %v653
    %655 = vdwg.mxu0
    %657 = vrot.lane.b32.xlu0 %v630, 32
    %v658 = vpop.permute.xlu0 %657
    %v659 = vsel %vm132, %v658, 0
    %661 = vmatpush.msra.mxu0 0.0
    %662 = vmatpush.msra.mxu0 0.0
    %663 = vmatpush.msra.mxu0 0.0
    %664 = vmatpush.msra.mxu0 0.0
    %665 = vmatpush.msra.mxu0 0.0
    %666 = vmatpush.msra.mxu0 0.0
    %667 = vmatpush.msra.mxu0 0.0
    %668 = vmatpush.msra.mxu0 0.0
    %669 = vmatpush.msra.mxu0 0.0
    %670 = vmatpush.msra.mxu0 0.0
    %671 = vmatpush.msra.mxu0 0.0
    %672 = vmatpush.msra.mxu0 0.0
    %673 = vmatpush.msra.mxu0 %v31
    %674 = vmatpush.msra.mxu0 %v30
    %675 = vmatpush.msra.mxu0 %v29
    %676 = vmatpush.msra.mxu0 %v28
    %677 = vmatmul.f32.gmra.mxu0 %v659
    %v678 = vpop.f32.mrf.mxu0
    %v679 = vadd.f32 %v654, %v678
    %680 = vdwg.mxu0
    %v681 = vadd.f32 %v679, %v239
    %v682 = vxor.u32 %v681, 2147483648
    %v683 = vmul.f32 %v682, 1.442695
    %v684 = vpow.pop %v683
    %v685 = vadd.f32 %v684, 1.0
    %v686 = vrcp.pop %v685
    %v687 = vmul.f32 %v685, %v686
    %v688 = vsub.f32 1.0, %v687
    %v689 = vmul.f32 %v686, %v688
    %v690 = vadd.f32 %v686, %v689
    %vm691 = vweird.f32 %v685
    %vm692 = vweird.f32 %v686
    %vm693 = vmor %vm691, %vm692
    %v694 = vsel %vm693, %v686, %v690
    %v695 = vand.u32 2147483647, %v685
    %vm696 = vcmp.eq.f32.partialorder %v695, 8.507059e+37
    %v697 = vand.u32 %v685, 2147483648
    %v698 = vor.u32 1.1754944e-38, %v697
    %v699 = vsel %vm696, %v698, %v694
    %v700 = vmul.f32 1.0, %v699
    %v701 = vtanh.pop %v681
    %v702 = vmul.f32 %v700, %v565
    %704 = vrot.lane.b32.xlu0 %v701, 64
    %v705 = vpop.permute.xlu0 %704
    %v707 = vmul.f32 %v700, %v705
    %709 = vrot.lane.b32.xlu0 %v707, 32
    %v710 = vpop.permute.xlu0 %709
    %v712 = vadd.f32 %v702, %v710
    %v713 = vtanh.pop %v712
    %715 = vrot.lane.b32.xlu0 %v713, 64
    %v716 = vpop.permute.xlu0 %715
    %v718 = vmul.f32 %v700, %v716
    %v719 = vld [vmem:[#allocation2 + $0x20] sm:$0xff]
    %720 = vmatpush.msra.mxu0 0.0
    %721 = vmatpush.msra.mxu0 0.0
    %722 = vmatpush.msra.mxu0 0.0
    %723 = vmatpush.msra.mxu0 0.0
    %724 = vmatpush.msra.mxu0 0.0
    %725 = vmatpush.msra.mxu0 0.0
    %726 = vmatpush.msra.mxu0 0.0
    %727 = vmatpush.msra.mxu0 0.0
    %728 = vmatpush.msra.mxu0 0.0
    %729 = vmatpush.msra.mxu0 0.0
    %730 = vmatpush.msra.mxu0 0.0
    %731 = vmatpush.msra.mxu0 0.0
    %732 = vmatpush.msra.mxu0 %v35
    %733 = vmatpush.msra.mxu0 %v34
    %734 = vmatpush.msra.mxu0 %v33
    %735 = vmatpush.msra.mxu0 %v32
    %736 = vmatmul.f32.gmra.mxu0 %v659
    %v737 = vpop.f32.mrf.mxu0
    %v738 = vadd.f32 0.0, %v737
    %739 = vdwg.mxu0
    %v740 = vadd.f32 %v719, %v738
    %v741 = vxor.u32 %v740, 2147483648
    %v742 = vmul.f32 %v741, 1.442695
    %v743 = vpow.pop %v742
    %v744 = vadd.f32 %v743, 1.0
    %v745 = vrcp.pop %v744
    %v746 = vmul.f32 %v744, %v745
    %v747 = vsub.f32 1.0, %v746
    %v748 = vmul.f32 %v745, %v747
    %v749 = vadd.f32 %v745, %v748
    %vm750 = vweird.f32 %v744
    %vm751 = vweird.f32 %v745
    %vm752 = vmor %vm750, %vm751
    %v753 = vsel %vm752, %v745, %v749
    %v754 = vand.u32 2147483647, %v744
    %vm755 = vcmp.eq.f32.partialorder %v754, 8.507059e+37
    %v756 = vand.u32 %v744, 2147483648
    %v757 = vor.u32 1.1754944e-38, %v756
    %v758 = vsel %vm755, %v757, %v753
    %v759 = vmul.f32 1.0, %v758
    %v760 = vtanh.pop %v740
    %v761 = vmul.f32 %v759, %v624
    %763 = vrot.lane.b32.xlu0 %v760, 64
    %v764 = vpop.permute.xlu0 %763
    %v766 = vmul.f32 %v759, %v764
    %768 = vrot.lane.b32.xlu0 %v766, 32
    %v769 = vpop.permute.xlu0 %768
    %v771 = vadd.f32 %v761, %v769
    %v772 = vtanh.pop %v771
    %774 = vrot.lane.b32.xlu0 %v772, 64
    %v775 = vpop.permute.xlu0 %774
    %v777 = vmul.f32 %v759, %v775
    %779 = vrot.lane.b32.xlu0 %v718, 32
    %v780 = vpop.permute.xlu0 %779
    %v781 = vsel %vm132, %v780, 0
    %783 = vmatpush.msra.mxu0 0.0
    %784 = vmatpush.msra.mxu0 0.0
    %785 = vmatpush.msra.mxu0 0.0
    %786 = vmatpush.msra.mxu0 0.0
    %787 = vmatpush.msra.mxu0 0.0
    %788 = vmatpush.msra.mxu0 0.0
    %789 = vmatpush.msra.mxu0 0.0
    %790 = vmatpush.msra.mxu0 0.0
    %791 = vmatpush.msra.mxu0 0.0
    %792 = vmatpush.msra.mxu0 0.0
    %793 = vmatpush.msra.mxu0 0.0
    %794 = vmatpush.msra.mxu0 0.0
    %795 = vmatpush.msra.mxu0 %v39
    %796 = vmatpush.msra.mxu0 %v38
    %797 = vmatpush.msra.mxu0 %v37
    %798 = vmatpush.msra.mxu0 %v36
    %799 = vmatmul.f32.gmra.mxu0 %v781
    %v800 = vpop.f32.mrf.mxu0
    %v801 = vadd.f32 0.0, %v800
    %802 = vdwg.mxu0
    %804 = vrot.lane.b32.xlu0 %v777, 32
    %v805 = vpop.permute.xlu0 %804
    %v806 = vsel %vm132, %v805, 0
    %808 = vmatpush.msra.mxu0 0.0
    %809 = vmatpush.msra.mxu0 0.0
    %810 = vmatpush.msra.mxu0 0.0
    %811 = vmatpush.msra.mxu0 0.0
    %812 = vmatpush.msra.mxu0 0.0
    %813 = vmatpush.msra.mxu0 0.0
    %814 = vmatpush.msra.mxu0 0.0
    %815 = vmatpush.msra.mxu0 0.0
    %816 = vmatpush.msra.mxu0 0.0
    %817 = vmatpush.msra.mxu0 0.0
    %818 = vmatpush.msra.mxu0 0.0
    %819 = vmatpush.msra.mxu0 0.0
    %820 = vmatpush.msra.mxu0 %v31
    %821 = vmatpush.msra.mxu0 %v30
    %822 = vmatpush.msra.mxu0 %v29
    %823 = vmatpush.msra.mxu0 %v28
    %824 = vmatmul.f32.gmra.mxu0 %v806
    %v825 = vpop.f32.mrf.mxu0
    %v826 = vadd.f32 %v801, %v825
    %827 = vdwg.mxu0
    %v828 = vadd.f32 %v826, %v239
    %v829 = vxor.u32 %v828, 2147483648
    %v830 = vmul.f32 %v829, 1.442695
    %v831 = vpow.pop %v830
    %v832 = vadd.f32 %v831, 1.0
    %v833 = vrcp.pop %v832
    %v834 = vmul.f32 %v832, %v833
    %v835 = vsub.f32 1.0, %v834
    %v836 = vmul.f32 %v833, %v835
    %v837 = vadd.f32 %v833, %v836
    %vm838 = vweird.f32 %v832
    %vm839 = vweird.f32 %v833
    %vm840 = vmor %vm838, %vm839
    %v841 = vsel %vm840, %v833, %v837
    %v842 = vand.u32 2147483647, %v832
    %vm843 = vcmp.eq.f32.partialorder %v842, 8.507059e+37
    %v844 = vand.u32 %v832, 2147483648
    %v845 = vor.u32 1.1754944e-38, %v844
    %v846 = vsel %vm843, %v845, %v841
    %v847 = vmul.f32 1.0, %v846
    %v848 = vtanh.pop %v828
    %v849 = vmul.f32 %v847, %v712
    %851 = vrot.lane.b32.xlu0 %v848, 64
    %v852 = vpop.permute.xlu0 %851
    %v854 = vmul.f32 %v847, %v852
    %856 = vrot.lane.b32.xlu0 %v854, 32
    %v857 = vpop.permute.xlu0 %856
    %v859 = vadd.f32 %v849, %v857
    %v860 = vtanh.pop %v859
    %862 = vrot.lane.b32.xlu0 %v860, 64
    %v863 = vpop.permute.xlu0 %862
    %v865 = vmul.f32 %v847, %v863
    %v866 = vld [vmem:[#allocation2 + $0x28] sm:$0xff]
    %867 = vmatpush.msra.mxu0 0.0
    %868 = vmatpush.msra.mxu0 0.0
    %869 = vmatpush.msra.mxu0 0.0
    %870 = vmatpush.msra.mxu0 0.0
    %871 = vmatpush.msra.mxu0 0.0
    %872 = vmatpush.msra.mxu0 0.0
    %873 = vmatpush.msra.mxu0 0.0
    %874 = vmatpush.msra.mxu0 0.0
    %875 = vmatpush.msra.mxu0 0.0
    %876 = vmatpush.msra.mxu0 0.0
    %877 = vmatpush.msra.mxu0 0.0
    %878 = vmatpush.msra.mxu0 0.0
    %879 = vmatpush.msra.mxu0 %v35
    %880 = vmatpush.msra.mxu0 %v34
    %881 = vmatpush.msra.mxu0 %v33
    %882 = vmatpush.msra.mxu0 %v32
    %883 = vmatmul.f32.gmra.mxu0 %v806
    %v884 = vpop.f32.mrf.mxu0
    %v885 = vadd.f32 0.0, %v884
    %886 = vdwg.mxu0
    %v887 = vadd.f32 %v866, %v885
    %v888 = vxor.u32 %v887, 2147483648
    %v889 = vmul.f32 %v888, 1.442695
    %v890 = vpow.pop %v889
    %v891 = vadd.f32 %v890, 1.0
    %v892 = vrcp.pop %v891
    %v893 = vmul.f32 %v891, %v892
    %v894 = vsub.f32 1.0, %v893
    %v895 = vmul.f32 %v892, %v894
    %v896 = vadd.f32 %v892, %v895
    %vm897 = vweird.f32 %v891
    %vm898 = vweird.f32 %v892
    %vm899 = vmor %vm897, %vm898
    %v900 = vsel %vm899, %v892, %v896
    %v901 = vand.u32 2147483647, %v891
    %vm902 = vcmp.eq.f32.partialorder %v901, 8.507059e+37
    %v903 = vand.u32 %v891, 2147483648
    %v904 = vor.u32 1.1754944e-38, %v903
    %v905 = vsel %vm902, %v904, %v900
    %v906 = vmul.f32 1.0, %v905
    %v907 = vtanh.pop %v887
    %v908 = vmul.f32 %v906, %v771
    %910 = vrot.lane.b32.xlu0 %v907, 64
    %v911 = vpop.permute.xlu0 %910
    %v913 = vmul.f32 %v906, %v911
    %915 = vrot.lane.b32.xlu0 %v913, 32
    %v916 = vpop.permute.xlu0 %915
    %v918 = vadd.f32 %v908, %v916
    %v919 = vtanh.pop %v918
    %921 = vrot.lane.b32.xlu0 %v919, 64
    %v922 = vpop.permute.xlu0 %921
    %v924 = vmul.f32 %v906, %v922
    %926 = vrot.lane.b32.xlu0 %v865, 32
    %v927 = vpop.permute.xlu0 %926
    %v928 = vsel %vm132, %v927, 0
    %930 = vmatpush.msra.mxu0 0.0
    %931 = vmatpush.msra.mxu0 0.0
    %932 = vmatpush.msra.mxu0 0.0
    %933 = vmatpush.msra.mxu0 0.0
    %934 = vmatpush.msra.mxu0 0.0
    %935 = vmatpush.msra.mxu0 0.0
    %936 = vmatpush.msra.mxu0 0.0
    %937 = vmatpush.msra.mxu0 0.0
    %938 = vmatpush.msra.mxu0 0.0
    %939 = vmatpush.msra.mxu0 0.0
    %940 = vmatpush.msra.mxu0 0.0
    %941 = vmatpush.msra.mxu0 0.0
    %942 = vmatpush.msra.mxu0 %v39
    %943 = vmatpush.msra.mxu0 %v38
    %944 = vmatpush.msra.mxu0 %v37
    %945 = vmatpush.msra.mxu0 %v36
    %946 = vmatmul.f32.gmra.mxu0 %v928
    %v947 = vpop.f32.mrf.mxu0
    %v948 = vadd.f32 0.0, %v947
    %949 = vdwg.mxu0
    %951 = vrot.lane.b32.xlu0 %v924, 32
    %v952 = vpop.permute.xlu0 %951
    %v953 = vsel %vm132, %v952, 0
    %955 = vmatpush.msra.mxu0 0.0
    %956 = vmatpush.msra.mxu0 0.0
    %957 = vmatpush.msra.mxu0 0.0
    %958 = vmatpush.msra.mxu0 0.0
    %959 = vmatpush.msra.mxu0 0.0
    %960 = vmatpush.msra.mxu0 0.0
    %961 = vmatpush.msra.mxu0 0.0
    %962 = vmatpush.msra.mxu0 0.0
    %963 = vmatpush.msra.mxu0 0.0
    %964 = vmatpush.msra.mxu0 0.0
    %965 = vmatpush.msra.mxu0 0.0
    %966 = vmatpush.msra.mxu0 0.0
    %967 = vmatpush.msra.mxu0 %v31
    %968 = vmatpush.msra.mxu0 %v30
    %969 = vmatpush.msra.mxu0 %v29
    %970 = vmatpush.msra.mxu0 %v28
    %971 = vmatmul.f32.gmra.mxu0 %v953
    %v972 = vpop.f32.mrf.mxu0
    %v973 = vadd.f32 %v948, %v972
    %974 = vdwg.mxu0
    %v975 = vadd.f32 %v973, %v239
    %v976 = vxor.u32 %v975, 2147483648
    %v977 = vmul.f32 %v976, 1.442695
    %v978 = vpow.pop %v977
    %v979 = vadd.f32 %v978, 1.0
    %v980 = vrcp.pop %v979
    %v981 = vmul.f32 %v979, %v980
    %v982 = vsub.f32 1.0, %v981
    %v983 = vmul.f32 %v980, %v982
    %v984 = vadd.f32 %v980, %v983
    %vm985 = vweird.f32 %v979
    %vm986 = vweird.f32 %v980
    %vm987 = vmor %vm985, %vm986
    %v988 = vsel %vm987, %v980, %v984
    %v989 = vand.u32 2147483647, %v979
    %vm990 = vcmp.eq.f32.partialorder %v989, 8.507059e+37
    %v991 = vand.u32 %v979, 2147483648
    %v992 = vor.u32 1.1754944e-38, %v991
    %v993 = vsel %vm990, %v992, %v988
    %v994 = vmul.f32 1.0, %v993
    %v995 = vtanh.pop %v975
    %v996 = vmul.f32 %v994, %v859
    %998 = vrot.lane.b32.xlu0 %v995, 64
    %v999 = vpop.permute.xlu0 %998
    %v1001 = vmul.f32 %v994, %v999
    %1003 = vrot.lane.b32.xlu0 %v1001, 32
    %v1004 = vpop.permute.xlu0 %1003
    %v1006 = vadd.f32 %v996, %v1004
    %v1007 = vtanh.pop %v1006
    %1009 = vrot.lane.b32.xlu0 %v1007, 64
    %v1010 = vpop.permute.xlu0 %1009
    %v1012 = vmul.f32 %v994, %v1010
    %v1013 = vld [vmem:[#allocation2 + $0x30] sm:$0xff]
    %1014 = vmatpush.msra.mxu0 0.0
    %1015 = vmatpush.msra.mxu0 0.0
    %1016 = vmatpush.msra.mxu0 0.0
    %1017 = vmatpush.msra.mxu0 0.0
    %1018 = vmatpush.msra.mxu0 0.0
    %1019 = vmatpush.msra.mxu0 0.0
    %1020 = vmatpush.msra.mxu0 0.0
    %1021 = vmatpush.msra.mxu0 0.0
    %1022 = vmatpush.msra.mxu0 0.0
    %1023 = vmatpush.msra.mxu0 0.0
    %1024 = vmatpush.msra.mxu0 0.0
    %1025 = vmatpush.msra.mxu0 0.0
    %1026 = vmatpush.msra.mxu0 %v35
    %1027 = vmatpush.msra.mxu0 %v34
    %1028 = vmatpush.msra.mxu0 %v33
    %1029 = vmatpush.msra.mxu0 %v32
    %1030 = vmatmul.f32.gmra.mxu0 %v953
    %v1031 = vpop.f32.mrf.mxu0
    %v1032 = vadd.f32 0.0, %v1031
    %1033 = vdwg.mxu0
    %v1034 = vadd.f32 %v1013, %v1032
    %v1035 = vxor.u32 %v1034, 2147483648
    %v1036 = vmul.f32 %v1035, 1.442695
    %v1037 = vpow.pop %v1036
    %v1038 = vadd.f32 %v1037, 1.0
    %v1039 = vrcp.pop %v1038
    %v1040 = vmul.f32 %v1038, %v1039
    %v1041 = vsub.f32 1.0, %v1040
    %v1042 = vmul.f32 %v1039, %v1041
    %v1043 = vadd.f32 %v1039, %v1042
    %vm1044 = vweird.f32 %v1038
    %vm1045 = vweird.f32 %v1039
    %vm1046 = vmor %vm1044, %vm1045
    %v1047 = vsel %vm1046, %v1039, %v1043
    %v1048 = vand.u32 2147483647, %v1038
    %vm1049 = vcmp.eq.f32.partialorder %v1048, 8.507059e+37
    %v1050 = vand.u32 %v1038, 2147483648
    %v1051 = vor.u32 1.1754944e-38, %v1050
    %v1052 = vsel %vm1049, %v1051, %v1047
    %v1053 = vmul.f32 1.0, %v1052
    %v1054 = vtanh.pop %v1034
    %v1055 = vmul.f32 %v1053, %v918
    %1057 = vrot.lane.b32.xlu0 %v1054, 64
    %v1058 = vpop.permute.xlu0 %1057
    %v1060 = vmul.f32 %v1053, %v1058
    %1062 = vrot.lane.b32.xlu0 %v1060, 32
    %v1063 = vpop.permute.xlu0 %1062
    %v1065 = vadd.f32 %v1055, %v1063
    %v1066 = vtanh.pop %v1065
    %1068 = vrot.lane.b32.xlu0 %v1066, 64
    %v1069 = vpop.permute.xlu0 %1068
    %v1071 = vmul.f32 %v1053, %v1069
    %1073 = vrot.lane.b32.xlu0 %v1012, 32
    %v1074 = vpop.permute.xlu0 %1073
    %v1075 = vsel %vm132, %v1074, 0
    %1077 = vmatpush.msra.mxu0 0.0
    %1078 = vmatpush.msra.mxu0 0.0
    %1079 = vmatpush.msra.mxu0 0.0
    %1080 = vmatpush.msra.mxu0 0.0
    %1081 = vmatpush.msra.mxu0 0.0
    %1082 = vmatpush.msra.mxu0 0.0
    %1083 = vmatpush.msra.mxu0 0.0
    %1084 = vmatpush.msra.mxu0 0.0
    %1085 = vmatpush.msra.mxu0 0.0
    %1086 = vmatpush.msra.mxu0 0.0
    %1087 = vmatpush.msra.mxu0 0.0
    %1088 = vmatpush.msra.mxu0 0.0
    %1089 = vmatpush.msra.mxu0 %v39
    %1090 = vmatpush.msra.mxu0 %v38
    %1091 = vmatpush.msra.mxu0 %v37
    %1092 = vmatpush.msra.mxu0 %v36
    %1093 = vmatmul.f32.gmra.mxu0 %v1075
    %v1094 = vpop.f32.mrf.mxu0
    %v1095 = vadd.f32 0.0, %v1094
    %1096 = vdwg.mxu0
    %1098 = vrot.lane.b32.xlu0 %v1071, 32
    %v1099 = vpop.permute.xlu0 %1098
    %v1100 = vsel %vm132, %v1099, 0
    %1102 = vmatpush.msra.mxu0 0.0
    %1103 = vmatpush.msra.mxu0 0.0
    %1104 = vmatpush.msra.mxu0 0.0
    %1105 = vmatpush.msra.mxu0 0.0
    %1106 = vmatpush.msra.mxu0 0.0
    %1107 = vmatpush.msra.mxu0 0.0
    %1108 = vmatpush.msra.mxu0 0.0
    %1109 = vmatpush.msra.mxu0 0.0
    %1110 = vmatpush.msra.mxu0 0.0
    %1111 = vmatpush.msra.mxu0 0.0
    %1112 = vmatpush.msra.mxu0 0.0
    %1113 = vmatpush.msra.mxu0 0.0
    %1114 = vmatpush.msra.mxu0 %v31
    %1115 = vmatpush.msra.mxu0 %v30
    %1116 = vmatpush.msra.mxu0 %v29
    %1117 = vmatpush.msra.mxu0 %v28
    %1118 = vmatmul.f32.gmra.mxu0 %v1100
    %v1119 = vpop.f32.mrf.mxu0
    %v1120 = vadd.f32 %v1095, %v1119
    %1121 = vdwg.mxu0
    %v1122 = vadd.f32 %v1120, %v239
    %v1123 = vxor.u32 %v1122, 2147483648
    %v1124 = vmul.f32 %v1123, 1.442695
    %v1125 = vpow.pop %v1124
    %v1126 = vadd.f32 %v1125, 1.0
    %v1127 = vrcp.pop %v1126
    %v1128 = vmul.f32 %v1126, %v1127
    %v1129 = vsub.f32 1.0, %v1128
    %v1130 = vmul.f32 %v1127, %v1129
    %v1131 = vadd.f32 %v1127, %v1130
    %vm1132 = vweird.f32 %v1126
    %vm1133 = vweird.f32 %v1127
    %vm1134 = vmor %vm1132, %vm1133
    %v1135 = vsel %vm1134, %v1127, %v1131
    %v1136 = vand.u32 2147483647, %v1126
    %vm1137 = vcmp.eq.f32.partialorder %v1136, 8.507059e+37
    %v1138 = vand.u32 %v1126, 2147483648
    %v1139 = vor.u32 1.1754944e-38, %v1138
    %v1140 = vsel %vm1137, %v1139, %v1135
    %v1141 = vmul.f32 1.0, %v1140
    %v1142 = vtanh.pop %v1122
    %v1143 = vmul.f32 %v1141, %v1006
    %1145 = vrot.lane.b32.xlu0 %v1142, 64
    %v1146 = vpop.permute.xlu0 %1145
    %v1148 = vmul.f32 %v1141, %v1146
    %1150 = vrot.lane.b32.xlu0 %v1148, 32
    %v1151 = vpop.permute.xlu0 %1150
    %v1153 = vadd.f32 %v1143, %v1151
    %v1154 = vtanh.pop %v1153
    %1156 = vrot.lane.b32.xlu0 %v1154, 64
    %v1157 = vpop.permute.xlu0 %1156
    %v1159 = vmul.f32 %v1141, %v1157
    %v1160 = vld [vmem:[#allocation2 + $0x38] sm:$0xff]
    %1161 = vmatpush.msra.mxu0 0.0
    %1162 = vmatpush.msra.mxu0 0.0
    %1163 = vmatpush.msra.mxu0 0.0
    %1164 = vmatpush.msra.mxu0 0.0
    %1165 = vmatpush.msra.mxu0 0.0
    %1166 = vmatpush.msra.mxu0 0.0
    %1167 = vmatpush.msra.mxu0 0.0
    %1168 = vmatpush.msra.mxu0 0.0
    %1169 = vmatpush.msra.mxu0 0.0
    %1170 = vmatpush.msra.mxu0 0.0
    %1171 = vmatpush.msra.mxu0 0.0
    %1172 = vmatpush.msra.mxu0 0.0
    %1173 = vmatpush.msra.mxu0 %v35
    %1174 = vmatpush.msra.mxu0 %v34
    %1175 = vmatpush.msra.mxu0 %v33
    %1176 = vmatpush.msra.mxu0 %v32
    %1177 = vmatmul.f32.gmra.mxu0 %v1100
    %v1178 = vpop.f32.mrf.mxu0
    %v1179 = vadd.f32 0.0, %v1178
    %1180 = vdwg.mxu0
    %v1181 = vadd.f32 %v1160, %v1179
    %v1182 = vxor.u32 %v1181, 2147483648
    %v1183 = vmul.f32 %v1182, 1.442695
    %v1184 = vpow.pop %v1183
    %v1185 = vadd.f32 %v1184, 1.0
    %v1186 = vrcp.pop %v1185
    %v1187 = vmul.f32 %v1185, %v1186
    %v1188 = vsub.f32 1.0, %v1187
    %v1189 = vmul.f32 %v1186, %v1188
    %v1190 = vadd.f32 %v1186, %v1189
    %vm1191 = vweird.f32 %v1185
    %vm1192 = vweird.f32 %v1186
    %vm1193 = vmor %vm1191, %vm1192
    %v1194 = vsel %vm1193, %v1186, %v1190
    %v1195 = vand.u32 2147483647, %v1185
    %vm1196 = vcmp.eq.f32.partialorder %v1195, 8.507059e+37
    %v1197 = vand.u32 %v1185, 2147483648
    %v1198 = vor.u32 1.1754944e-38, %v1197
    %v1199 = vsel %vm1196, %v1198, %v1194
    %v1200 = vmul.f32 1.0, %v1199
    %v1201 = vtanh.pop %v1181
    %v1202 = vmul.f32 %v1200, %v1065
    %1204 = vrot.lane.b32.xlu0 %v1201, 64
    %v1205 = vpop.permute.xlu0 %1204
    %v1207 = vmul.f32 %v1200, %v1205
    %1209 = vrot.lane.b32.xlu0 %v1207, 32
    %v1210 = vpop.permute.xlu0 %1209
    %v1212 = vadd.f32 %v1202, %v1210
    %v1213 = vtanh.pop %v1212
    %1215 = vrot.lane.b32.xlu0 %v1213, 64
    %v1216 = vpop.permute.xlu0 %1215
    %v1218 = vmul.f32 %v1200, %v1216
    %1220 = vrot.lane.b32.xlu0 %v1159, 32
    %v1221 = vpop.permute.xlu0 %1220
    %v1222 = vsel %vm132, %v1221, 0
    %1224 = vmatpush.msra.mxu0 0.0
    %1225 = vmatpush.msra.mxu0 0.0
    %1226 = vmatpush.msra.mxu0 0.0
    %1227 = vmatpush.msra.mxu0 0.0
    %1228 = vmatpush.msra.mxu0 0.0
    %1229 = vmatpush.msra.mxu0 0.0
    %1230 = vmatpush.msra.mxu0 0.0
    %1231 = vmatpush.msra.mxu0 0.0
    %1232 = vmatpush.msra.mxu0 0.0
    %1233 = vmatpush.msra.mxu0 0.0
    %1234 = vmatpush.msra.mxu0 0.0
    %1235 = vmatpush.msra.mxu0 0.0
    %1236 = vmatpush.msra.mxu0 %v39
    %1237 = vmatpush.msra.mxu0 %v38
    %1238 = vmatpush.msra.mxu0 %v37
    %1239 = vmatpush.msra.mxu0 %v36
    %1240 = vmatmul.f32.gmra.mxu0 %v1222
    %v1241 = vpop.f32.mrf.mxu0
    %v1242 = vadd.f32 0.0, %v1241
    %1243 = vdwg.mxu0
    %1245 = vrot.lane.b32.xlu0 %v1218, 32
    %v1246 = vpop.permute.xlu0 %1245
    %v1247 = vsel %vm132, %v1246, 0
    %1249 = vmatpush.msra.mxu0 0.0
    %1250 = vmatpush.msra.mxu0 0.0
    %1251 = vmatpush.msra.mxu0 0.0
    %1252 = vmatpush.msra.mxu0 0.0
    %1253 = vmatpush.msra.mxu0 0.0
    %1254 = vmatpush.msra.mxu0 0.0
    %1255 = vmatpush.msra.mxu0 0.0
    %1256 = vmatpush.msra.mxu0 0.0
    %1257 = vmatpush.msra.mxu0 0.0
    %1258 = vmatpush.msra.mxu0 0.0
    %1259 = vmatpush.msra.mxu0 0.0
    %1260 = vmatpush.msra.mxu0 0.0
    %1261 = vmatpush.msra.mxu0 %v31
    %1262 = vmatpush.msra.mxu0 %v30
    %1263 = vmatpush.msra.mxu0 %v29
    %1264 = vmatpush.msra.mxu0 %v28
    %1265 = vmatmul.f32.gmra.mxu0 %v1247
    %v1266 = vpop.f32.mrf.mxu0
    %v1267 = vadd.f32 %v1242, %v1266
    %1268 = vdwg.mxu0
    %v1269 = vadd.f32 %v1267, %v239
    %v1270 = vxor.u32 %v1269, 2147483648
    %v1271 = vmul.f32 %v1270, 1.442695
    %v1272 = vpow.pop %v1271
    %v1273 = vadd.f32 %v1272, 1.0
    %v1274 = vrcp.pop %v1273
    %v1275 = vmul.f32 %v1273, %v1274
    %v1276 = vsub.f32 1.0, %v1275
    %v1277 = vmul.f32 %v1274, %v1276
    %v1278 = vadd.f32 %v1274, %v1277
    %vm1279 = vweird.f32 %v1273
    %vm1280 = vweird.f32 %v1274
    %vm1281 = vmor %vm1279, %vm1280
    %v1282 = vsel %vm1281, %v1274, %v1278
    %v1283 = vand.u32 2147483647, %v1273
    %vm1284 = vcmp.eq.f32.partialorder %v1283, 8.507059e+37
    %v1285 = vand.u32 %v1273, 2147483648
    %v1286 = vor.u32 1.1754944e-38, %v1285
    %v1287 = vsel %vm1284, %v1286, %v1282
    %v1288 = vmul.f32 1.0, %v1287
    %v1289 = vtanh.pop %v1269
    %v1290 = vmul.f32 %v1288, %v1153
    %1292 = vrot.lane.b32.xlu0 %v1289, 64
    %v1293 = vpop.permute.xlu0 %1292
    %v1295 = vmul.f32 %v1288, %v1293
    %1297 = vrot.lane.b32.xlu0 %v1295, 32
    %v1298 = vpop.permute.xlu0 %1297
    %v1300 = vadd.f32 %v1290, %v1298
    %v1301 = vtanh.pop %v1300
    %1303 = vrot.lane.b32.xlu0 %v1301, 64
    %v1304 = vpop.permute.xlu0 %1303
    %v1306 = vmul.f32 %v1288, %v1304
    %v1307 = vperm.slane %v42, 0
    %1309 = vrot.lane.b32.xlu0 %v1307, 96
    %v1310 = vpop.permute.xlu0 %1309
    %v1312 = vmul.f32 %v1306, %v1310
    %1314 = vrot.lane.b32.xlu0 %v1312, 32
    %v1315 = vpop.permute.xlu0 %1314
    %v1317 = vsel %vm132, %v1315, 0.0
    %1318 = vadd.xlane.f32.xlu0 %v1317
    %v1319 = vpop.xlane.xlu0 %1318
    %v1320 = vperm.slane %v43, 0
    %v1321 = vadd.f32 %v1319, %v1320
    %vm1322 = vcmask 7168
    %1323 = vst.msk [vmem:[%s2] sm:$0xff] %vm1322, %v1321
    // Predicated region
    $region14: #{tpu_custom_call.1} parent=1 // pred_check
      _
    $region15: #{tpu_custom_call.1} parent=1 // pred_check_branch
      %1325 = sbr.rel (0) target = $region17
    $region16: #{tpu_custom_call.1} parent=1 // pred_region
      _
    $region17: #{tpu_custom_call.1} parent=1 // pred_fallthru
      _
    // Predicated region
    $region18: #{tpu_custom_call.1} parent=1 // pred_check
      _
    $region19: #{tpu_custom_call.1} parent=1 // pred_check_branch
      %1327 = sbr.rel (0) target = $region21
    $region20: #{tpu_custom_call.1} parent=1 // pred_region
      _
    $region21: #{tpu_custom_call.1} parent=1 // pred_fallthru
      _
    %1328 = vsyncpa [#allocation4], 1

</llo_original>
